<compile_context>
chip_gen: v7x
topology: tpu7x:2x2x1
jax: 0.10.0
libtpu: 0.0.40
codegen_flags: <defaults>
</compile_context>

<pallas_src>
import math

import jax
import jax.numpy as jnp
from jax.experimental import pallas as pl
from jax.experimental.pallas import tpu as pltpu

FEATURE = 64        # featureSize in ChirpNet.__init__
DFF = 128           # feed-forward hidden size of the stand-in encoder layer


def _ln_halves(z, gamma2, beta2, d, eps=1e-5):
    """Per-branch LayerNorm over each d-lane half of a lane-concatenated (R, 2d) slab."""
    def _norm(u):
        mu = jnp.mean(u, axis=-1, keepdims=True)
        var = jnp.mean((u - mu) ** 2, axis=-1, keepdims=True)
        return (u - mu) * jax.lax.rsqrt(var + eps)
    zn = jnp.concatenate([_norm(z[:, :d]), _norm(z[:, d:])], axis=-1)
    return zn * gamma2 + beta2


def chirp_kernel(x_ref, wp_ref, bp_ref, wqkv_ref, addqkv_ref,
                 wo_ref, w1_ref, w2_ref, b1_ref, vecs_ref, out_ref):
    """One grid step = TN (batch, frame-group) pairs; hori+vert branches fused.

    x_ref     : (TN, C, S, H*W) bf16  raw radar block (native layout)
    wp_ref    : (C*H*W, D)      bf16  inputProj weight (channel-major rows)
    bp_ref    : (1, D)          f32   inputProj bias
    wqkv_ref  : (D, 6D)         bf16  [Wq_h*sc | Wk_h | Wv_h | Wq_v*sc | Wk_v | Wv_v]
    addqkv_ref: (S, 6D)         f32   [posq_h | posk_h | bv_h | posq_v | posk_v | bv_v]
    wo_ref    : (2D, 2D)        bf16  block-diag(Wo_h, Wo_v)
    w1_ref    : (2D, 2DFF)      bf16  block-diag(W1_h, W1_v)
    w2_ref    : (2DFF, 2D)      bf16  block-diag(W2_h, W2_v)
    b1_ref    : (1, 2DFF)       f32   [b1_h | b1_v]
    vecs_ref  : (6, 2D)         f32   rows = [bo, ln1_g, ln1_b, b2, ln2_g, ln2_b] (h|v)
    out_ref   : (TN, S, 2D)     f32   hori result in lanes [:D], vert in lanes [D:]
    """
    TN, C, S, HW = x_ref.shape
    D = bp_ref.shape[-1]
    R = TN * S

    # --- inputProj: single K = C*HW contraction.  Lane-concat of the chirp
    # channels reproduces the PyTorch permute(0,2,1,3,4).view flattening
    # ([c, h, w] with c slowest) without any HBM transpose. ---
    x = x_ref[...]                                                  # (TN, C, S, HW)
    xcat = jnp.concatenate([x[:, c].reshape(R, HW) for c in range(C)], axis=-1)
    srcf = (jnp.dot(xcat, wp_ref[...], preferred_element_type=jnp.float32)
            + bp_ref[...])                                          # (R, D) f32

    # --- fused QKV for BOTH branches: one wide (R, 6D) MXU dot. ---
    qkv = (jnp.dot(srcf.astype(wqkv_ref.dtype), wqkv_ref[...],
                   preferred_element_type=jnp.float32)
           .reshape(TN, S, 6 * D) + addqkv_ref[...][None])

    # --- batched single-head attention over both branches (2*TN batches). ---
    q = jnp.concatenate([qkv[:, :, 0 * D:1 * D], qkv[:, :, 3 * D:4 * D]], axis=0)
    k = jnp.concatenate([qkv[:, :, 1 * D:2 * D], qkv[:, :, 4 * D:5 * D]], axis=0)
    v = jnp.concatenate([qkv[:, :, 2 * D:3 * D], qkv[:, :, 5 * D:6 * D]], axis=0)
    s = jnp.einsum('bqd,bkd->bqk', q, k, preferred_element_type=jnp.float32)
    s = s - jnp.max(s, axis=-1, keepdims=True)
    p = jnp.exp(s)
    p = p / jnp.sum(p, axis=-1, keepdims=True)      # exact softmax (parity)
    attn = jnp.einsum('bqk,bkd->bqd', p, v, preferred_element_type=jnp.float32)

    # back to a lane-dense (R, 2D) slab: hori in lanes [:D], vert in [D:].
    attn2 = jnp.concatenate([attn[:TN].reshape(R, D), attn[TN:].reshape(R, D)],
                            axis=-1)

    vecs = vecs_ref[...]
    bo2, g1, be1, b2, g2, be2 = (vecs[0:1], vecs[1:2], vecs[2:3],
                                 vecs[3:4], vecs[4:5], vecs[5:6])

    proj = (jnp.dot(attn2.astype(wo_ref.dtype), wo_ref[...],
                    preferred_element_type=jnp.float32) + bo2)
    src2 = jnp.concatenate([srcf, srcf], axis=-1)   # shared inputProj feeds both branches
    y = _ln_halves(src2 + proj, g1, be1, D)

    h = jnp.maximum(jnp.dot(y.astype(w1_ref.dtype), w1_ref[...],
                            preferred_element_type=jnp.float32) + b1_ref[...], 0.0)
    ff = (jnp.dot(h.astype(w2_ref.dtype), w2_ref[...],
                  preferred_element_type=jnp.float32) + b2)
    out = _ln_halves(y + ff, g2, be2, D)
    out_ref[...] = out.reshape(TN, S, 2 * D)


def _choose_tn(N, S, in_pair_bytes, out_pair_bytes, weight_bytes,
               vmem_budget=28 << 20):
    """Largest divisor of N such that (a) R = TN*S targets ~256 MXU rows per dot
    and (b) resident weights (counted double-buffered, conservatively) plus
    double-buffered in/out blocks plus intermediate working set stay inside a
    budget that is safe even on v7x (64 MiB VMEM, 32 MiB scoped).  No forced
    multi-step grid: on single-TC chips a serial grid only adds overhead; when
    the grid does have >1 step it is marked "parallel" for v7x megacore."""
    row_cap = max(1, 256 // max(S, 1))
    avail = max(vmem_budget - 2 * weight_bytes, 1)
    per_pair = 4 * (in_pair_bytes + out_pair_bytes)   # 2x dbl-buffer + ~2x intermediates
    mem_cap = max(1, avail // max(per_pair, 1))
    cap = max(1, min(N, row_cap, mem_cap))
    tn = 1
    for t in range(1, cap + 1):
        if N % t == 0:
            tn = t
    return tn


def _const_spec(shape):
    nd = len(shape)
    return pl.BlockSpec(shape, lambda i, _nd=nd: (0,) * _nd)


def chirp_encoder_fused(x, weights, *, d, dff):
    """x: (N, C, S, H*W) bf16; weights: [wp, bp, wqkv, addqkv, wo, w1, w2, b1, vecs]."""
    N, C, S, HW = x.shape
    in_pair = C * S * HW * x.dtype.itemsize
    out_pair = S * 2 * d * 4
    weight_bytes = sum(int(w.size) * w.dtype.itemsize for w in weights)
    TN = _choose_tn(N, S, in_pair, out_pair, weight_bytes)

    # Advisory cost for XLA's scheduler (flops dominated by the block-diag FFN).
    flops = 2 * N * S * (C * HW * d + d * 6 * d + 4 * S * d
                         + (2 * d) * (2 * d) + 2 * (2 * d) * (2 * dff))
    cost = pl.CostEstimate(
        flops=int(flops),
        transcendentals=int(2 * N * S * S),
        bytes_accessed=int(x.nbytes + N * S * 2 * d * 4 + weight_bytes))

    in_specs = ([pl.BlockSpec((TN, C, S, HW), lambda i: (i, 0, 0, 0))]
                + [_const_spec(w.shape) for w in weights])
    return pl.pallas_call(
        chirp_kernel,
        out_shape=jax.ShapeDtypeStruct((N, S, 2 * d), jnp.float32),
        grid_spec=pltpu.PrefetchScalarGridSpec(
            num_scalar_prefetch=0,
            grid=(N // TN,),
            in_specs=in_specs,
            out_specs=pl.BlockSpec((TN, S, 2 * d), lambda i: (i, 0, 0)),
        ),
        compiler_params=pltpu.CompilerParams(
            dimension_semantics=("parallel",),
            vmem_limit_bytes=32 << 20),
        cost_estimate=cost,
    )(x, *weights)


def _block_diag(a, b):
    ra, ca = a.shape
    rb, cb = b.shape
    top = jnp.concatenate([a, jnp.zeros((ra, cb), a.dtype)], axis=1)
    bot = jnp.concatenate([jnp.zeros((rb, ca), b.dtype), b], axis=1)
    return jnp.concatenate([top, bot], axis=0)


def _pack_weights(params, S, d, mxu_dtype=jnp.bfloat16):
    """Fold scale / biases / positional embedding and lane-fuse both branches."""
    scale = 1.0 / math.sqrt(d)
    pos = params["pos"]                               # (S, d)

    def branch_slabs(br):
        (wq, bq, wk, bk, wv, bv, wo, bo, g1, be1, w1, b1, w2, b2, g2, be2) = br
        wq_s = wq * scale
        posq = pos @ wq_s + bq * scale                # pos, bq and 1/sqrt(d) folded
        posk = pos @ wk + bk
        return dict(
            wqkv=jnp.concatenate([wq_s, wk, wv], axis=-1),                       # (d, 3d)
            add=jnp.concatenate([posq, posk, jnp.broadcast_to(bv, (S, d))], -1),  # (S, 3d)
            wo=wo, bo=bo, g1=g1, be1=be1, w1=w1, b1=b1, w2=w2, b2=b2, g2=g2, be2=be2)

    h = branch_slabs(params["hori"])
    v = branch_slabs(params["vert"])

    wp = params["wp"]                                                # (C*HW, d)
    bp = params["bp"]                                                # (1, d)
    wqkv = jnp.concatenate([h["wqkv"], v["wqkv"]], axis=-1)          # (d, 6d)
    addqkv = jnp.concatenate([h["add"], v["add"]], axis=-1)          # (S, 6d)
    wo = _block_diag(h["wo"], v["wo"])                               # (2d, 2d)
    w1 = _block_diag(h["w1"], v["w1"])                               # (2d, 2dff)
    w2 = _block_diag(h["w2"], v["w2"])                               # (2dff, 2d)
    b1 = jnp.concatenate([h["b1"], v["b1"]], axis=-1)                # (1, 2dff)
    vecs = jnp.concatenate([
        jnp.concatenate([h["bo"], v["bo"]], -1),
        jnp.concatenate([h["g1"], v["g1"]], -1),
        jnp.concatenate([h["be1"], v["be1"]], -1),
        jnp.concatenate([h["b2"], v["b2"]], -1),
        jnp.concatenate([h["g2"], v["g2"]], -1),
        jnp.concatenate([h["be2"], v["be2"]], -1)], axis=0)          # (6, 2d)

    mxu = lambda a: a.astype(mxu_dtype)   # bf16 MXU path, f32 accumulation in-kernel
    return [mxu(wp), bp, mxu(wqkv), addqkv, mxu(wo), mxu(w1), mxu(w2), b1, vecs]


def init_params(key, din, d, dff, num_keypoints, num_frames):
    keys = iter(jax.random.split(key, 64))

    def lin(fan_in, shape):
        return jax.random.normal(next(keys), shape, jnp.float32) / math.sqrt(fan_in)

    def branch():
        # [wq,bq, wk,bk, wv,bv, wo,bo, ln1_g,ln1_b, w1,b1, w2,b2, ln2_g,ln2_b]
        return [
            lin(d, (d, d)), jnp.zeros((1, d), jnp.float32),
            lin(d, (d, d)), jnp.zeros((1, d), jnp.float32),
            lin(d, (d, d)), jnp.zeros((1, d), jnp.float32),
            lin(d, (d, d)), jnp.zeros((1, d), jnp.float32),
            jnp.ones((1, d), jnp.float32), jnp.zeros((1, d), jnp.float32),
            lin(d, (d, dff)), jnp.zeros((1, dff), jnp.float32),
            lin(dff, (dff, d)), jnp.zeros((1, d), jnp.float32),
            jnp.ones((1, d), jnp.float32), jnp.zeros((1, d), jnp.float32),
        ]

    # PositionEmbeddingLearned(numFrames, 1, num_pos_feats=d//2):
    # grid is (numFrames rows) x (1 col); pos = concat(col_embed, row_embed).
    npf = d // 2
    row = jax.random.normal(next(keys), (num_frames, npf), jnp.float32)
    col = jax.random.normal(next(keys), (1, npf), jnp.float32)
    pos = jnp.concatenate([jnp.tile(col, (num_frames, 1)), row], axis=-1)  # (S, d)

    return {
        "wp": lin(din, (din, d)),                       # inputProj weight (shared)
        "bp": jnp.zeros((1, d), jnp.float32),           # inputProj bias
        "hori": branch(),                               # horiChirpTrans
        "vert": branch(),                               # vertChirpTrans
        "pos": pos,
        # queryEmbed exists in the module but is unused with encoderOnly=True.
        "query": jax.random.normal(next(keys), (num_keypoints, d), jnp.float32),
    }


def chirp_net_forward(horiMap, vertMap, params):
    """horiMap, vertMap: (B, G, C=2, S, H, W) f32.  Returns (horiMaps, vertMaps)
    of shape (B, S, G, FEATURE) — the stacked per-frame-group transformer outputs."""
    del vertMap  # faithful to original code: vert branch re-uses the hori features
    B, G, C, S, H, W = horiMap.shape
    N, HW, D = B * G, H * W, FEATURE

    # Native-layout reshape only (no HBM transpose) + bf16 cast for the MXU path.
    x = horiMap.reshape(N, C, S, HW).astype(jnp.bfloat16)
    weights = _pack_weights(params, S, D)

    out = chirp_encoder_fused(x, weights, d=D, dff=DFF)   # (N, S, 2*D)
    h_out = out[..., :D].reshape(B, G, S, D)
    v_out = out[..., D:].reshape(B, G, S, D)

    # TODO(synk): the original forward has no return statement; returning the
    #             accumulated horiMaps / vertMaps it constructs (stacked on dim 2).
    return (jnp.transpose(h_out, (0, 2, 1, 3)),
            jnp.transpose(v_out, (0, 2, 1, 3)))


if __name__ == "__main__":
    key = jax.random.PRNGKey(0)
    B, G, C, S, H, W = 2, 2, 2, 8, 16, 16     # batch, numGroupFrames, chirp channels,
    numKeypoints = 7                          # numFrames, heatmapSize, heatmapSize
    k1, k2, k3 = jax.random.split(key, 3)
    horiMap = jax.random.normal(k1, (B, G, C, S, H, W), jnp.float32)
    vertMap = jax.random.normal(k2, (B, G, C, S, H, W), jnp.float32)
    params = init_params(k3, C * H * W, FEATURE, DFF, numKeypoints, S)

    hori_out, vert_out = chirp_net_forward(horiMap, vertMap, params)
    jax.block_until_ready((hori_out, vert_out))
    assert hori_out.shape == (B, S, G, FEATURE)
    assert vert_out.shape == (B, S, G, FEATURE)
    assert bool(jnp.all(jnp.isfinite(hori_out))) and bool(jnp.all(jnp.isfinite(vert_out)))
    print("KERNEL_OK")
</pallas_src>

<mosaic_0001>
module attributes {stable_mosaic.version = 11 : i64} {
  func.func @chirp_kernel(%arg0: i32, %arg1: memref<4x2x8x256xbf16, #tpu.memory_space<vmem>>, %arg2: memref<512x64xbf16, #tpu.memory_space<vmem>>, %arg3: memref<1x64xf32, #tpu.memory_space<vmem>>, %arg4: memref<64x384xbf16, #tpu.memory_space<vmem>>, %arg5: memref<8x384xf32, #tpu.memory_space<vmem>>, %arg6: memref<128x128xbf16, #tpu.memory_space<vmem>>, %arg7: memref<128x256xbf16, #tpu.memory_space<vmem>>, %arg8: memref<256x128xbf16, #tpu.memory_space<vmem>>, %arg9: memref<1x256xf32, #tpu.memory_space<vmem>>, %arg10: memref<6x128xf32, #tpu.memory_space<vmem>>, %arg11: memref<4x8x128xf32, #tpu.memory_space<vmem>>) attributes {dimension_semantics = [#tpu.dimension_semantics<parallel>], iteration_bounds = array<i64: 1>, scalar_prefetch = 0 : i64, scratch_operands = 0 : i64, tpu.core_type = #tpu.core_type<tc>, window_params = [{transform_indices = @transform_0, window_bounds = array<i64: 4, 2, 8, 256>}, {pipeline_mode = #tpu.pipeline_mode<synchronous>, transform_indices = @transform_1, window_bounds = array<i64: 512, 64>}, {pipeline_mode = #tpu.pipeline_mode<synchronous>, transform_indices = @transform_2, window_bounds = array<i64: 1, 64>}, {pipeline_mode = #tpu.pipeline_mode<synchronous>, transform_indices = @transform_3, window_bounds = array<i64: 64, 384>}, {pipeline_mode = #tpu.pipeline_mode<synchronous>, transform_indices = @transform_4, window_bounds = array<i64: 8, 384>}, {pipeline_mode = #tpu.pipeline_mode<synchronous>, transform_indices = @transform_5, window_bounds = array<i64: 128, 128>}, {pipeline_mode = #tpu.pipeline_mode<synchronous>, transform_indices = @transform_6, window_bounds = array<i64: 128, 256>}, {pipeline_mode = #tpu.pipeline_mode<synchronous>, transform_indices = @transform_7, window_bounds = array<i64: 256, 128>}, {pipeline_mode = #tpu.pipeline_mode<synchronous>, transform_indices = @transform_8, window_bounds = array<i64: 1, 256>}, {pipeline_mode = #tpu.pipeline_mode<synchronous>, transform_indices = @transform_9, window_bounds = array<i64: 6, 128>}, {transform_indices = @transform_10, window_bounds = array<i64: 4, 8, 128>}]} {
    %c0 = arith.constant 0 : index
    %c0_0 = arith.constant 0 : index
    %c0_1 = arith.constant 0 : index
    %c0_2 = arith.constant 0 : index
    %0 = vector.load %arg1[%c0, %c0_0, %c0_1, %c0_2] : memref<4x2x8x256xbf16, #tpu.memory_space<vmem>>, vector<4x2x8x256xbf16>
    %1 = vector.extract_strided_slice %0 {offsets = [0, 0, 0, 0], sizes = [4, 1, 8, 256], strides = [1, 1, 1, 1]} : vector<4x2x8x256xbf16> to vector<4x1x8x256xbf16>
    %2 = vector.shape_cast %1 : vector<4x1x8x256xbf16> to vector<4x8x256xbf16>
    %3 = vector.shape_cast %2 : vector<4x8x256xbf16> to vector<32x256xbf16>
    %4 = vector.extract_strided_slice %0 {offsets = [0, 1, 0, 0], sizes = [4, 1, 8, 256], strides = [1, 1, 1, 1]} : vector<4x2x8x256xbf16> to vector<4x1x8x256xbf16>
    %5 = vector.shape_cast %4 : vector<4x1x8x256xbf16> to vector<4x8x256xbf16>
    %6 = vector.shape_cast %5 : vector<4x8x256xbf16> to vector<32x256xbf16>
    %7 = tpu.concatenate %3, %6 in 1 : vector<32x256xbf16>, vector<32x256xbf16> -> vector<32x512xbf16>
    %c0_3 = arith.constant 0 : index
    %c0_4 = arith.constant 0 : index
    %8 = vector.load %arg2[%c0_3, %c0_4] : memref<512x64xbf16, #tpu.memory_space<vmem>>, vector<512x64xbf16>
    %cst = arith.constant dense<0.000000e+00> : vector<32x64xf32>
    %9 = tpu.matmul %7, %8, %cst {dimension_numbers = #tpu.dot_dimension_numbers<[1], [0], [0], [1], [0, 0, 1, 1], [], []>} : vector<32x512xbf16>, vector<512x64xbf16>, vector<32x64xf32> -> vector<32x64xf32>
    %c0_5 = arith.constant 0 : index
    %c0_6 = arith.constant 0 : index
    %10 = vector.load %arg3[%c0_5, %c0_6] : memref<1x64xf32, #tpu.memory_space<vmem>>, vector<1x64xf32>
    %11 = vector.broadcast %10 : vector<1x64xf32> to vector<32x64xf32>
    %12 = arith.addf %9, %11 : vector<32x64xf32>
    %13 = arith.truncf %12 : vector<32x64xf32> to vector<32x64xbf16>
    %c0_7 = arith.constant 0 : index
    %c0_8 = arith.constant 0 : index
    %14 = vector.load %arg4[%c0_7, %c0_8] : memref<64x384xbf16, #tpu.memory_space<vmem>>, vector<64x384xbf16>
    %cst_9 = arith.constant dense<0.000000e+00> : vector<32x384xf32>
    %15 = tpu.matmul %13, %14, %cst_9 {dimension_numbers = #tpu.dot_dimension_numbers<[1], [0], [0], [1], [0, 0, 1, 1], [], []>} : vector<32x64xbf16>, vector<64x384xbf16>, vector<32x384xf32> -> vector<32x384xf32>
    %16 = vector.shape_cast %15 : vector<32x384xf32> to vector<4x8x384xf32>
    %c0_10 = arith.constant 0 : index
    %c0_11 = arith.constant 0 : index
    %17 = vector.load %arg5[%c0_10, %c0_11] : memref<8x384xf32, #tpu.memory_space<vmem>>, vector<8x384xf32>
    %18 = vector.shape_cast %17 : vector<8x384xf32> to vector<1x8x384xf32>
    %19 = vector.broadcast %18 : vector<1x8x384xf32> to vector<4x8x384xf32>
    %20 = arith.addf %16, %19 : vector<4x8x384xf32>
    %21 = vector.extract_strided_slice %20 {offsets = [0, 0, 0], sizes = [4, 8, 64], strides = [1, 1, 1]} : vector<4x8x384xf32> to vector<4x8x64xf32>
    %22 = vector.extract_strided_slice %20 {offsets = [0, 0, 192], sizes = [4, 8, 64], strides = [1, 1, 1]} : vector<4x8x384xf32> to vector<4x8x64xf32>
    %23 = tpu.concatenate %21, %22 in 0 : vector<4x8x64xf32>, vector<4x8x64xf32> -> vector<8x8x64xf32>
    %24 = vector.extract_strided_slice %20 {offsets = [0, 0, 64], sizes = [4, 8, 64], strides = [1, 1, 1]} : vector<4x8x384xf32> to vector<4x8x64xf32>
    %25 = vector.extract_strided_slice %20 {offsets = [0, 0, 256], sizes = [4, 8, 64], strides = [1, 1, 1]} : vector<4x8x384xf32> to vector<4x8x64xf32>
    %26 = tpu.concatenate %24, %25 in 0 : vector<4x8x64xf32>, vector<4x8x64xf32> -> vector<8x8x64xf32>
    %27 = vector.extract_strided_slice %20 {offsets = [0, 0, 128], sizes = [4, 8, 64], strides = [1, 1, 1]} : vector<4x8x384xf32> to vector<4x8x64xf32>
    %28 = vector.extract_strided_slice %20 {offsets = [0, 0, 320], sizes = [4, 8, 64], strides = [1, 1, 1]} : vector<4x8x384xf32> to vector<4x8x64xf32>
    %29 = tpu.concatenate %27, %28 in 0 : vector<4x8x64xf32>, vector<4x8x64xf32> -> vector<8x8x64xf32>
    "tpu.trace_start"() <{level = 10 : i32, message = "bqd,bkd->bqk"}> : () -> ()
    %cst_12 = arith.constant dense<0.000000e+00> : vector<8x8x8xf32>
    %30 = tpu.matmul %23, %26, %cst_12 {dimension_numbers = #tpu.dot_dimension_numbers<[2], [2], [1], [1], [0, 0, 0, 1, 1, 1], [0], [0]>} : vector<8x8x64xf32>, vector<8x8x64xf32>, vector<8x8x8xf32> -> vector<8x8x8xf32>
    "tpu.trace_stop"() : () -> ()
    %cst_13 = arith.constant dense<0xFF800000> : vector<8x8xf32>
    %31 = vector.multi_reduction <maximumf>, %30, %cst_13 [2] : vector<8x8x8xf32> to vector<8x8xf32>
    %32 = vector.shape_cast %31 : vector<8x8xf32> to vector<8x8x1xf32>
    %33 = vector.broadcast %32 : vector<8x8x1xf32> to vector<8x8x8xf32>
    %34 = arith.subf %30, %33 : vector<8x8x8xf32>
    %35 = math.exp %34 : vector<8x8x8xf32>
    %cst_14 = arith.constant dense<0.000000e+00> : vector<8x8xf32>
    %36 = vector.multi_reduction <add>, %35, %cst_14 [2] : vector<8x8x8xf32> to vector<8x8xf32>
    %37 = vector.shape_cast %36 : vector<8x8xf32> to vector<8x8x1xf32>
    %38 = vector.broadcast %37 : vector<8x8x1xf32> to vector<8x8x8xf32>
    %39 = arith.divf %35, %38 : vector<8x8x8xf32>
    "tpu.trace_start"() <{level = 10 : i32, message = "bqk,bkd->bqd"}> : () -> ()
    %cst_15 = arith.constant dense<0.000000e+00> : vector<8x8x64xf32>
    %40 = tpu.matmul %39, %29, %cst_15 {dimension_numbers = #tpu.dot_dimension_numbers<[2], [1], [1], [2], [0, 0, 0, 1, 1, 2], [0], [0]>} : vector<8x8x8xf32>, vector<8x8x64xf32>, vector<8x8x64xf32> -> vector<8x8x64xf32>
    "tpu.trace_stop"() : () -> ()
    %41 = vector.extract_strided_slice %40 {offsets = [0, 0, 0], sizes = [4, 8, 64], strides = [1, 1, 1]} : vector<8x8x64xf32> to vector<4x8x64xf32>
    %42 = vector.shape_cast %41 : vector<4x8x64xf32> to vector<32x64xf32>
    %43 = vector.extract_strided_slice %40 {offsets = [4, 0, 0], sizes = [4, 8, 64], strides = [1, 1, 1]} : vector<8x8x64xf32> to vector<4x8x64xf32>
    %44 = vector.shape_cast %43 : vector<4x8x64xf32> to vector<32x64xf32>
    %45 = tpu.concatenate %42, %44 in 1 : vector<32x64xf32>, vector<32x64xf32> -> vector<32x128xf32>
    %c0_16 = arith.constant 0 : index
    %c0_17 = arith.constant 0 : index
    %46 = vector.load %arg10[%c0_16, %c0_17] : memref<6x128xf32, #tpu.memory_space<vmem>>, vector<6x128xf32>
    %47 = vector.extract_strided_slice %46 {offsets = [0, 0], sizes = [1, 128], strides = [1, 1]} : vector<6x128xf32> to vector<1x128xf32>
    %48 = vector.extract_strided_slice %46 {offsets = [1, 0], sizes = [1, 128], strides = [1, 1]} : vector<6x128xf32> to vector<1x128xf32>
    %49 = vector.extract_strided_slice %46 {offsets = [2, 0], sizes = [1, 128], strides = [1, 1]} : vector<6x128xf32> to vector<1x128xf32>
    %50 = vector.extract_strided_slice %46 {offsets = [3, 0], sizes = [1, 128], strides = [1, 1]} : vector<6x128xf32> to vector<1x128xf32>
    %51 = vector.extract_strided_slice %46 {offsets = [4, 0], sizes = [1, 128], strides = [1, 1]} : vector<6x128xf32> to vector<1x128xf32>
    %52 = vector.extract_strided_slice %46 {offsets = [5, 0], sizes = [1, 128], strides = [1, 1]} : vector<6x128xf32> to vector<1x128xf32>
    %53 = arith.truncf %45 : vector<32x128xf32> to vector<32x128xbf16>
    %c0_18 = arith.constant 0 : index
    %c0_19 = arith.constant 0 : index
    %54 = vector.load %arg6[%c0_18, %c0_19] : memref<128x128xbf16, #tpu.memory_space<vmem>>, vector<128x128xbf16>
    %cst_20 = arith.constant dense<0.000000e+00> : vector<32x128xf32>
    %55 = tpu.matmul %53, %54, %cst_20 {dimension_numbers = #tpu.dot_dimension_numbers<[1], [0], [0], [1], [0, 0, 1, 1], [], []>} : vector<32x128xbf16>, vector<128x128xbf16>, vector<32x128xf32> -> vector<32x128xf32>
    %56 = vector.broadcast %47 : vector<1x128xf32> to vector<32x128xf32>
    %57 = arith.addf %55, %56 : vector<32x128xf32>
    %58 = tpu.concatenate %12, %12 in 1 : vector<32x64xf32>, vector<32x64xf32> -> vector<32x128xf32>
    %59 = arith.addf %58, %57 : vector<32x128xf32>
    %60 = vector.extract_strided_slice %59 {offsets = [0, 0], sizes = [32, 64], strides = [1, 1]} : vector<32x128xf32> to vector<32x64xf32>
    %cst_21 = arith.constant dense<0.000000e+00> : vector<32xf32>
    %61 = vector.multi_reduction <add>, %60, %cst_21 [1] : vector<32x64xf32> to vector<32xf32>
    %62 = vector.shape_cast %61 : vector<32xf32> to vector<32x1xf32>
    %cst_22 = arith.constant 6.400000e+01 : f32
    %63 = vector.broadcast %cst_22 : f32 to vector<32x1xf32>
    %64 = arith.divf %62, %63 : vector<32x1xf32>
    %65 = vector.broadcast %64 : vector<32x1xf32> to vector<32x64xf32>
    %66 = arith.subf %60, %65 : vector<32x64xf32>
    %67 = arith.mulf %66, %66 : vector<32x64xf32>
    %cst_23 = arith.constant dense<0.000000e+00> : vector<32xf32>
    %68 = vector.multi_reduction <add>, %67, %cst_23 [1] : vector<32x64xf32> to vector<32xf32>
    %69 = vector.shape_cast %68 : vector<32xf32> to vector<32x1xf32>
    %cst_24 = arith.constant 6.400000e+01 : f32
    %70 = vector.broadcast %cst_24 : f32 to vector<32x1xf32>
    %71 = arith.divf %69, %70 : vector<32x1xf32>
    %72 = vector.broadcast %64 : vector<32x1xf32> to vector<32x64xf32>
    %73 = arith.subf %60, %72 : vector<32x64xf32>
    %cst_25 = arith.constant 9.99999974E-6 : f32
    %74 = vector.broadcast %cst_25 : f32 to vector<32x1xf32>
    %75 = arith.addf %71, %74 : vector<32x1xf32>
    %76 = math.rsqrt %75 : vector<32x1xf32>
    %77 = vector.broadcast %76 : vector<32x1xf32> to vector<32x64xf32>
    %78 = arith.mulf %73, %77 : vector<32x64xf32>
    %79 = vector.extract_strided_slice %59 {offsets = [0, 64], sizes = [32, 64], strides = [1, 1]} : vector<32x128xf32> to vector<32x64xf32>
    %cst_26 = arith.constant dense<0.000000e+00> : vector<32xf32>
    %80 = vector.multi_reduction <add>, %79, %cst_26 [1] : vector<32x64xf32> to vector<32xf32>
    %81 = vector.shape_cast %80 : vector<32xf32> to vector<32x1xf32>
    %cst_27 = arith.constant 6.400000e+01 : f32
    %82 = vector.broadcast %cst_27 : f32 to vector<32x1xf32>
    %83 = arith.divf %81, %82 : vector<32x1xf32>
    %84 = vector.broadcast %83 : vector<32x1xf32> to vector<32x64xf32>
    %85 = arith.subf %79, %84 : vector<32x64xf32>
    %86 = arith.mulf %85, %85 : vector<32x64xf32>
    %cst_28 = arith.constant dense<0.000000e+00> : vector<32xf32>
    %87 = vector.multi_reduction <add>, %86, %cst_28 [1] : vector<32x64xf32> to vector<32xf32>
    %88 = vector.shape_cast %87 : vector<32xf32> to vector<32x1xf32>
    %cst_29 = arith.constant 6.400000e+01 : f32
    %89 = vector.broadcast %cst_29 : f32 to vector<32x1xf32>
    %90 = arith.divf %88, %89 : vector<32x1xf32>
    %91 = vector.broadcast %83 : vector<32x1xf32> to vector<32x64xf32>
    %92 = arith.subf %79, %91 : vector<32x64xf32>
    %cst_30 = arith.constant 9.99999974E-6 : f32
    %93 = vector.broadcast %cst_30 : f32 to vector<32x1xf32>
    %94 = arith.addf %90, %93 : vector<32x1xf32>
    %95 = math.rsqrt %94 : vector<32x1xf32>
    %96 = vector.broadcast %95 : vector<32x1xf32> to vector<32x64xf32>
    %97 = arith.mulf %92, %96 : vector<32x64xf32>
    %98 = tpu.concatenate %78, %97 in 1 : vector<32x64xf32>, vector<32x64xf32> -> vector<32x128xf32>
    %99 = vector.broadcast %48 : vector<1x128xf32> to vector<32x128xf32>
    %100 = arith.mulf %98, %99 : vector<32x128xf32>
    %101 = vector.broadcast %49 : vector<1x128xf32> to vector<32x128xf32>
    %102 = arith.addf %100, %101 : vector<32x128xf32>
    %103 = arith.truncf %102 : vector<32x128xf32> to vector<32x128xbf16>
    %c0_31 = arith.constant 0 : index
    %c0_32 = arith.constant 0 : index
    %104 = vector.load %arg7[%c0_31, %c0_32] : memref<128x256xbf16, #tpu.memory_space<vmem>>, vector<128x256xbf16>
    %cst_33 = arith.constant dense<0.000000e+00> : vector<32x256xf32>
    %105 = tpu.matmul %103, %104, %cst_33 {dimension_numbers = #tpu.dot_dimension_numbers<[1], [0], [0], [1], [0, 0, 1, 1], [], []>} : vector<32x128xbf16>, vector<128x256xbf16>, vector<32x256xf32> -> vector<32x256xf32>
    %c0_34 = arith.constant 0 : index
    %c0_35 = arith.constant 0 : index
    %106 = vector.load %arg9[%c0_34, %c0_35] : memref<1x256xf32, #tpu.memory_space<vmem>>, vector<1x256xf32>
    %107 = vector.broadcast %106 : vector<1x256xf32> to vector<32x256xf32>
    %108 = arith.addf %105, %107 : vector<32x256xf32>
    %cst_36 = arith.constant 0.000000e+00 : f32
    %109 = vector.broadcast %cst_36 : f32 to vector<32x256xf32>
    %110 = arith.maximumf %108, %109 : vector<32x256xf32>
    %111 = arith.truncf %110 : vector<32x256xf32> to vector<32x256xbf16>
    %c0_37 = arith.constant 0 : index
    %c0_38 = arith.constant 0 : index
    %112 = vector.load %arg8[%c0_37, %c0_38] : memref<256x128xbf16, #tpu.memory_space<vmem>>, vector<256x128xbf16>
    %cst_39 = arith.constant dense<0.000000e+00> : vector<32x128xf32>
    %113 = tpu.matmul %111, %112, %cst_39 {dimension_numbers = #tpu.dot_dimension_numbers<[1], [0], [0], [1], [0, 0, 1, 1], [], []>} : vector<32x256xbf16>, vector<256x128xbf16>, vector<32x128xf32> -> vector<32x128xf32>
    %114 = vector.broadcast %50 : vector<1x128xf32> to vector<32x128xf32>
    %115 = arith.addf %113, %114 : vector<32x128xf32>
    %116 = arith.addf %102, %115 : vector<32x128xf32>
    %117 = vector.extract_strided_slice %116 {offsets = [0, 0], sizes = [32, 64], strides = [1, 1]} : vector<32x128xf32> to vector<32x64xf32>
    %cst_40 = arith.constant dense<0.000000e+00> : vector<32xf32>
    %118 = vector.multi_reduction <add>, %117, %cst_40 [1] : vector<32x64xf32> to vector<32xf32>
    %119 = vector.shape_cast %118 : vector<32xf32> to vector<32x1xf32>
    %cst_41 = arith.constant 6.400000e+01 : f32
    %120 = vector.broadcast %cst_41 : f32 to vector<32x1xf32>
    %121 = arith.divf %119, %120 : vector<32x1xf32>
    %122 = vector.broadcast %121 : vector<32x1xf32> to vector<32x64xf32>
    %123 = arith.subf %117, %122 : vector<32x64xf32>
    %124 = arith.mulf %123, %123 : vector<32x64xf32>
    %cst_42 = arith.constant dense<0.000000e+00> : vector<32xf32>
    %125 = vector.multi_reduction <add>, %124, %cst_42 [1] : vector<32x64xf32> to vector<32xf32>
    %126 = vector.shape_cast %125 : vector<32xf32> to vector<32x1xf32>
    %cst_43 = arith.constant 6.400000e+01 : f32
    %127 = vector.broadcast %cst_43 : f32 to vector<32x1xf32>
    %128 = arith.divf %126, %127 : vector<32x1xf32>
    %129 = vector.broadcast %121 : vector<32x1xf32> to vector<32x64xf32>
    %130 = arith.subf %117, %129 : vector<32x64xf32>
    %cst_44 = arith.constant 9.99999974E-6 : f32
    %131 = vector.broadcast %cst_44 : f32 to vector<32x1xf32>
    %132 = arith.addf %128, %131 : vector<32x1xf32>
    %133 = math.rsqrt %132 : vector<32x1xf32>
    %134 = vector.broadcast %133 : vector<32x1xf32> to vector<32x64xf32>
    %135 = arith.mulf %130, %134 : vector<32x64xf32>
    %136 = vector.extract_strided_slice %116 {offsets = [0, 64], sizes = [32, 64], strides = [1, 1]} : vector<32x128xf32> to vector<32x64xf32>
    %cst_45 = arith.constant dense<0.000000e+00> : vector<32xf32>
    %137 = vector.multi_reduction <add>, %136, %cst_45 [1] : vector<32x64xf32> to vector<32xf32>
    %138 = vector.shape_cast %137 : vector<32xf32> to vector<32x1xf32>
    %cst_46 = arith.constant 6.400000e+01 : f32
    %139 = vector.broadcast %cst_46 : f32 to vector<32x1xf32>
    %140 = arith.divf %138, %139 : vector<32x1xf32>
    %141 = vector.broadcast %140 : vector<32x1xf32> to vector<32x64xf32>
    %142 = arith.subf %136, %141 : vector<32x64xf32>
    %143 = arith.mulf %142, %142 : vector<32x64xf32>
    %cst_47 = arith.constant dense<0.000000e+00> : vector<32xf32>
    %144 = vector.multi_reduction <add>, %143, %cst_47 [1] : vector<32x64xf32> to vector<32xf32>
    %145 = vector.shape_cast %144 : vector<32xf32> to vector<32x1xf32>
    %cst_48 = arith.constant 6.400000e+01 : f32
    %146 = vector.broadcast %cst_48 : f32 to vector<32x1xf32>
    %147 = arith.divf %145, %146 : vector<32x1xf32>
    %148 = vector.broadcast %140 : vector<32x1xf32> to vector<32x64xf32>
    %149 = arith.subf %136, %148 : vector<32x64xf32>
    %cst_49 = arith.constant 9.99999974E-6 : f32
    %150 = vector.broadcast %cst_49 : f32 to vector<32x1xf32>
    %151 = arith.addf %147, %150 : vector<32x1xf32>
    %152 = math.rsqrt %151 : vector<32x1xf32>
    %153 = vector.broadcast %152 : vector<32x1xf32> to vector<32x64xf32>
    %154 = arith.mulf %149, %153 : vector<32x64xf32>
    %155 = tpu.concatenate %135, %154 in 1 : vector<32x64xf32>, vector<32x64xf32> -> vector<32x128xf32>
    %156 = vector.broadcast %51 : vector<1x128xf32> to vector<32x128xf32>
    %157 = arith.mulf %155, %156 : vector<32x128xf32>
    %158 = vector.broadcast %52 : vector<1x128xf32> to vector<32x128xf32>
    %159 = arith.addf %157, %158 : vector<32x128xf32>
    %160 = vector.shape_cast %159 : vector<32x128xf32> to vector<4x8x128xf32>
    %c0_50 = arith.constant 0 : index
    %c0_51 = arith.constant 0 : index
    %c0_52 = arith.constant 0 : index
    %161 = vector.load %arg11[%c0_50, %c0_51, %c0_52] : memref<4x8x128xf32, #tpu.memory_space<vmem>>, vector<4x8x128xf32>
    tpu.vector_store %arg11[%c0_50, %c0_51, %c0_52], %160 {strides = array<i32>} : memref<4x8x128xf32, #tpu.memory_space<vmem>>, vector<4x8x128xf32>,
    return
  }
  func.func @transform_0(%arg0: i32) -> (i32, i32, i32, i32) {
    %c0_i32 = arith.constant 0 : i32
    %c0_i32_0 = arith.constant 0 : i32
    %c0_i32_1 = arith.constant 0 : i32
    %c0_i32_2 = arith.constant 0 : i32
    return %arg0, %c0_i32, %c0_i32_0, %c0_i32_1 : i32, i32, i32, i32
  }
  func.func @transform_1(%arg0: i32) -> (i32, i32) {
    %c0_i32 = arith.constant 0 : i32
    %c0_i32_0 = arith.constant 0 : i32
    %c0_i32_1 = arith.constant 0 : i32
    return %c0_i32, %c0_i32_0 : i32, i32
  }
  func.func @transform_2(%arg0: i32) -> (i32, i32) {
    %c0_i32 = arith.constant 0 : i32
    %c0_i32_0 = arith.constant 0 : i32
    %c0_i32_1 = arith.constant 0 : i32
    return %c0_i32, %c0_i32_0 : i32, i32
  }
  func.func @transform_3(%arg0: i32) -> (i32, i32) {
    %c0_i32 = arith.constant 0 : i32
    %c0_i32_0 = arith.constant 0 : i32
    %c0_i32_1 = arith.constant 0 : i32
    return %c0_i32, %c0_i32_0 : i32, i32
  }
  func.func @transform_4(%arg0: i32) -> (i32, i32) {
    %c0_i32 = arith.constant 0 : i32
    %c0_i32_0 = arith.constant 0 : i32
    %c0_i32_1 = arith.constant 0 : i32
    return %c0_i32, %c0_i32_0 : i32, i32
  }
  func.func @transform_5(%arg0: i32) -> (i32, i32) {
    %c0_i32 = arith.constant 0 : i32
    %c0_i32_0 = arith.constant 0 : i32
    %c0_i32_1 = arith.constant 0 : i32
    return %c0_i32, %c0_i32_0 : i32, i32
  }
  func.func @transform_6(%arg0: i32) -> (i32, i32) {
    %c0_i32 = arith.constant 0 : i32
    %c0_i32_0 = arith.constant 0 : i32
    %c0_i32_1 = arith.constant 0 : i32
    return %c0_i32, %c0_i32_0 : i32, i32
  }
  func.func @transform_7(%arg0: i32) -> (i32, i32) {
    %c0_i32 = arith.constant 0 : i32
    %c0_i32_0 = arith.constant 0 : i32
    %c0_i32_1 = arith.constant 0 : i32
    return %c0_i32, %c0_i32_0 : i32, i32
  }
  func.func @transform_8(%arg0: i32) -> (i32, i32) {
    %c0_i32 = arith.constant 0 : i32
    %c0_i32_0 = arith.constant 0 : i32
    %c0_i32_1 = arith.constant 0 : i32
    return %c0_i32, %c0_i32_0 : i32, i32
  }
  func.func @transform_9(%arg0: i32) -> (i32, i32) {
    %c0_i32 = arith.constant 0 : i32
    %c0_i32_0 = arith.constant 0 : i32
    %c0_i32_1 = arith.constant 0 : i32
    return %c0_i32, %c0_i32_0 : i32, i32
  }
  func.func @transform_10(%arg0: i32) -> (i32, i32, i32) {
    %c0_i32 = arith.constant 0 : i32
    %c0_i32_0 = arith.constant 0 : i32
    %c0_i32_1 = arith.constant 0 : i32
    return %arg0, %c0_i32, %c0_i32_0 : i32, i32, i32
  }
}

</mosaic_0001>

<llo_original>
// kernel: tpu_custom_call.1
$region0: #{tpu_custom_call.1}
  #allocation0 [shape = 'u32[]', space=smem, size = 0x4, offset = 0x4, fixed_abs, tag = 'smem constant byte address 0x4 - core index']
  #allocation1 [shape = 'u32[144,128]{1,0:T(1,128)}', space=vmem, size = 0x12000, scoped, tag = 'internal scratch']
  %s0 = inlined_call_operand.hbm [shape: bf16[4,2,8,256], index: 0, kind: input, shape index: {}]
  %s1 = inlined_call_operand.vmem [shape: bf16[512,64], index: 1, kind: input, shape index: {}]
  %s2 = inlined_call_operand.vmem [shape: f32[1,64], index: 2, kind: input, shape index: {}]
  %s3 = inlined_call_operand.vmem [shape: bf16[64,384], index: 3, kind: input, shape index: {}]
  %s4 = inlined_call_operand.vmem [shape: f32[8,384], index: 4, kind: input, shape index: {}]
  %s5 = inlined_call_operand.hbm [shape: bf16[128,128], index: 5, kind: input, shape index: {}]
  %s6 = inlined_call_operand.vmem [shape: bf16[128,256], index: 6, kind: input, shape index: {}]
  %s7 = inlined_call_operand.vmem [shape: bf16[256,128], index: 7, kind: input, shape index: {}]
  %s8 = inlined_call_operand.vmem [shape: f32[1,256], index: 8, kind: input, shape index: {}]
  %s9 = inlined_call_operand.vmem [shape: f32[6,128], index: 9, kind: input, shape index: {}]
  %s10 = inlined_call_operand.hbm [shape: f32[4,8,128], index: 10, kind: output, shape index: {}]
  %s11 = sld [smem:[#allocation0]]
  $region58: #{tpu_custom_call.1} parent=0
    _
  %s13 = ssub.s32 1, %s11
  %s14 = scalar_select 0, %s13, %s11
  $region1: #{tpu_custom_call.1} parent=0
    #allocation2 [shape = 'u8[32768]{0}', space=vmem, size = 0x8000, scoped, tag = 'input window, operand 0, single buffered']
    #allocation3 [shape = 's32[1]{0}', space=sflag, size = 0x4, scoped, tag = 'scoped memory for tpu_custom_call.1']
    #allocation4 [shape = 's32[1]{0}', space=sflag, size = 0x4, scoped, tag = 'scoped memory for tpu_custom_call.1']
    #allocation5 [shape = 'u8[32768]{0}', space=vmem, size = 0x8000, scoped, tag = 'input window, operand 5, single buffered']
    #allocation6 [shape = 's32[1]{0}', space=sflag, size = 0x4, scoped, tag = 'scoped memory for tpu_custom_call.1']
    #allocation7 [shape = 'u8[16384]{0}', space=vmem, size = 0x4000, scoped, tag = 'output window, operand 0, single buffered']
    %15 = vsyncpa [#allocation3], 0
    %16 = vsyncpa [#allocation6], 0
    %17 = vsyncpa [#allocation4], 0
    // Predicated region
    $region2: #{tpu_custom_call.1} parent=1 // pred_check
      _
    $region3: #{tpu_custom_call.1} parent=1 // pred_check_branch
      %19 = sbr.rel (0) target = $region5
    $region4: #{tpu_custom_call.1} parent=1 // pred_region
      %s21 = ssub.s32 1024, 1024
      %22 = vsyncadd [#allocation3], %s21
      %s23 = sshll.u32 [#allocation2], 4
      %s24 = int_to_ptr.vmem [resolvable:$true] %s23
      %29 = dma.hbm_to_vmem [thread:$0]  %s0, 1024, %s24, [#allocation3], 128, 128, 8
    $region5: #{tpu_custom_call.1} parent=1 // pred_fallthru
      _
    // Predicated region
    $region6: #{tpu_custom_call.1} parent=1 // pred_check
      _
    $region7: #{tpu_custom_call.1} parent=1 // pred_check_branch
      %31 = sbr.rel (0) target = $region9
    $region8: #{tpu_custom_call.1} parent=1 // pred_region
      _
    $region9: #{tpu_custom_call.1} parent=1 // pred_fallthru
      _
    // Predicated region
    $region10: #{tpu_custom_call.1} parent=1 // pred_check
      _
    $region11: #{tpu_custom_call.1} parent=1 // pred_check_branch
      %33 = sbr.rel (0) target = $region13
    $region12: #{tpu_custom_call.1} parent=1 // pred_region
      _
    $region13: #{tpu_custom_call.1} parent=1 // pred_fallthru
      _
    // Predicated region
    $region14: #{tpu_custom_call.1} parent=1 // pred_check
      _
    $region15: #{tpu_custom_call.1} parent=1 // pred_check_branch
      %35 = sbr.rel (0) target = $region17
    $region16: #{tpu_custom_call.1} parent=1 // pred_region
      _
    $region17: #{tpu_custom_call.1} parent=1 // pred_fallthru
      _
    // Predicated region
    $region18: #{tpu_custom_call.1} parent=1 // pred_check
      _
    $region19: #{tpu_custom_call.1} parent=1 // pred_check_branch
      %37 = sbr.rel (0) target = $region21
    $region20: #{tpu_custom_call.1} parent=1 // pred_region
      _
    $region21: #{tpu_custom_call.1} parent=1 // pred_fallthru
      _
    // Predicated region
    $region22: #{tpu_custom_call.1} parent=1 // pred_check
      _
    $region23: #{tpu_custom_call.1} parent=1 // pred_check_branch
      %39 = sbr.rel (0) target = $region25
    $region24: #{tpu_custom_call.1} parent=1 // pred_region
      %s41 = ssub.s32 1024, 1024
      %42 = vsyncadd [#allocation6], %s41
      %s43 = sshll.u32 [#allocation5], 4
      %s44 = int_to_ptr.vmem [resolvable:$true] %s43
      %49 = dma.hbm_to_vmem [thread:$0]  %s5, 1024, %s44, [#allocation6], 64, 64, 4
    $region25: #{tpu_custom_call.1} parent=1 // pred_fallthru
      _
    // Predicated region
    $region26: #{tpu_custom_call.1} parent=1 // pred_check
      _
    $region27: #{tpu_custom_call.1} parent=1 // pred_check_branch
      %51 = sbr.rel (0) target = $region29
    $region28: #{tpu_custom_call.1} parent=1 // pred_region
      _
    $region29: #{tpu_custom_call.1} parent=1 // pred_fallthru
      _
    // Predicated region
    $region30: #{tpu_custom_call.1} parent=1 // pred_check
      _
    $region31: #{tpu_custom_call.1} parent=1 // pred_check_branch
      %53 = sbr.rel (0) target = $region33
    $region32: #{tpu_custom_call.1} parent=1 // pred_region
      _
    $region33: #{tpu_custom_call.1} parent=1 // pred_fallthru
      _
    // Predicated region
    $region34: #{tpu_custom_call.1} parent=1 // pred_check
      _
    $region35: #{tpu_custom_call.1} parent=1 // pred_check_branch
      %55 = sbr.rel (0) target = $region37
    $region36: #{tpu_custom_call.1} parent=1 // pred_region
      _
    $region37: #{tpu_custom_call.1} parent=1 // pred_fallthru
      _
    // Predicated region
    $region38: #{tpu_custom_call.1} parent=1 // pred_check
      _
    $region39: #{tpu_custom_call.1} parent=1 // pred_check_branch
      %57 = sbr.rel (0) target = $region41
    $region40: #{tpu_custom_call.1} parent=1 // pred_region
      _
    $region41: #{tpu_custom_call.1} parent=1 // pred_fallthru
      _
    // Predicated region
    $region42: #{tpu_custom_call.1} parent=1 // pred_check
      _
    $region43: #{tpu_custom_call.1} parent=1 // pred_check_branch
      %59 = sbr.rel (0) target = $region45
    $region44: #{tpu_custom_call.1} parent=1 // pred_region
      %60 = dma.done [#allocation3], 1024
    $region45: #{tpu_custom_call.1} parent=1 // pred_fallthru
      _
    // Predicated region
    $region46: #{tpu_custom_call.1} parent=1 // pred_check
      _
    $region47: #{tpu_custom_call.1} parent=1 // pred_check_branch
      %62 = sbr.rel (0) target = $region49
    $region48: #{tpu_custom_call.1} parent=1 // pred_region
      %63 = dma.done [#allocation6], 1024
    $region49: #{tpu_custom_call.1} parent=1 // pred_fallthru
      _
    %v65 = vld [vmem:[#allocation2] sm:$0xff]
    %v66 = vld [vmem:[#allocation2 + $0x8] sm:$0xff]
    %v67 = vld [vmem:[#allocation2 + $0x10] sm:$0xff]
    %v68 = vld [vmem:[#allocation2 + $0x18] sm:$0xff]
    %v69 = vld [vmem:[#allocation2 + $0x20] sm:$0xff]
    %v70 = vld [vmem:[#allocation2 + $0x28] sm:$0xff]
    %v71 = vld [vmem:[#allocation2 + $0x30] sm:$0xff]
    %v72 = vld [vmem:[#allocation2 + $0x38] sm:$0xff]
    %v77 = vunpack.c.l.b16 %v65
    %v78 = vunpack.c.h.b16 %v65
    %v79 = vunpack.c.l.b16 %v67
    %v80 = vunpack.c.h.b16 %v67
    %v81 = vunpack.c.l.b16 %v69
    %v82 = vunpack.c.h.b16 %v69
    %v83 = vunpack.c.l.b16 %v71
    %v84 = vunpack.c.h.b16 %v71
    %v85 = vpack.c.b16 %v79, %v77
    %v86 = vpack.c.b16 %v80, %v78
    %v87 = vpack.c.b16 %v83, %v81
    %v88 = vpack.c.b16 %v84, %v82
    %v97 = vunpack.c.l.b16 %v66
    %v98 = vunpack.c.h.b16 %v66
    %v99 = vunpack.c.l.b16 %v68
    %v100 = vunpack.c.h.b16 %v68
    %v101 = vunpack.c.l.b16 %v70
    %v102 = vunpack.c.h.b16 %v70
    %v103 = vunpack.c.l.b16 %v72
    %v104 = vunpack.c.h.b16 %v72
    %v105 = vpack.c.b16 %v99, %v97
    %v106 = vpack.c.b16 %v100, %v98
    %v107 = vpack.c.b16 %v103, %v101
    %v108 = vpack.c.b16 %v104, %v102
    %v113 = vld [vmem:[%s1] sm:$0xf]
    %v114 = vld [vmem:[%s1 + $0x4] sm:$0xf]
    %v115 = vld [vmem:[%s1 + $0x8] sm:$0xf]
    %v116 = vld [vmem:[%s1 + $0xc] sm:$0xf]
    %v117 = vld [vmem:[%s1 + $0x10] sm:$0xf]
    %v118 = vld [vmem:[%s1 + $0x14] sm:$0xf]
    %v119 = vld [vmem:[%s1 + $0x18] sm:$0xf]
    %v120 = vld [vmem:[%s1 + $0x1c] sm:$0xf]
    %v121 = vld [vmem:[%s1 + $0x20] sm:$0xf]
    %v122 = vld [vmem:[%s1 + $0x24] sm:$0xf]
    %v123 = vld [vmem:[%s1 + $0x28] sm:$0xf]
    %v124 = vld [vmem:[%s1 + $0x2c] sm:$0xf]
    %v125 = vld [vmem:[%s1 + $0x30] sm:$0xf]
    %v126 = vld [vmem:[%s1 + $0x34] sm:$0xf]
    %v127 = vld [vmem:[%s1 + $0x38] sm:$0xf]
    %v128 = vld [vmem:[%s1 + $0x3c] sm:$0xf]
    %v129 = vld [vmem:[%s1 + $0x40] sm:$0xf]
    %v130 = vld [vmem:[%s1 + $0x44] sm:$0xf]
    %v131 = vld [vmem:[%s1 + $0x48] sm:$0xf]
    %v132 = vld [vmem:[%s1 + $0x4c] sm:$0xf]
    %v133 = vld [vmem:[%s1 + $0x50] sm:$0xf]
    %v134 = vld [vmem:[%s1 + $0x54] sm:$0xf]
    %v135 = vld [vmem:[%s1 + $0x58] sm:$0xf]
    %v136 = vld [vmem:[%s1 + $0x5c] sm:$0xf]
    %v137 = vld [vmem:[%s1 + $0x60] sm:$0xf]
    %v138 = vld [vmem:[%s1 + $0x64] sm:$0xf]
    %v139 = vld [vmem:[%s1 + $0x68] sm:$0xf]
    %v140 = vld [vmem:[%s1 + $0x6c] sm:$0xf]
    %v141 = vld [vmem:[%s1 + $0x70] sm:$0xf]
    %v142 = vld [vmem:[%s1 + $0x74] sm:$0xf]
    %v143 = vld [vmem:[%s1 + $0x78] sm:$0xf]
    %v144 = vld [vmem:[%s1 + $0x7c] sm:$0xf]
    %v145 = vld [vmem:[%s1 + $0x80] sm:$0xf]
    %v146 = vld [vmem:[%s1 + $0x84] sm:$0xf]
    %v147 = vld [vmem:[%s1 + $0x88] sm:$0xf]
    %v148 = vld [vmem:[%s1 + $0x8c] sm:$0xf]
    %v149 = vld [vmem:[%s1 + $0x90] sm:$0xf]
    %v150 = vld [vmem:[%s1 + $0x94] sm:$0xf]
    %v151 = vld [vmem:[%s1 + $0x98] sm:$0xf]
    %v152 = vld [vmem:[%s1 + $0x9c] sm:$0xf]
    %v153 = vld [vmem:[%s1 + $0xa0] sm:$0xf]
    %v154 = vld [vmem:[%s1 + $0xa4] sm:$0xf]
    %v155 = vld [vmem:[%s1 + $0xa8] sm:$0xf]
    %v156 = vld [vmem:[%s1 + $0xac] sm:$0xf]
    %v157 = vld [vmem:[%s1 + $0xb0] sm:$0xf]
    %v158 = vld [vmem:[%s1 + $0xb4] sm:$0xf]
    %v159 = vld [vmem:[%s1 + $0xb8] sm:$0xf]
    %v160 = vld [vmem:[%s1 + $0xbc] sm:$0xf]
    %v161 = vld [vmem:[%s1 + $0xc0] sm:$0xf]
    %v162 = vld [vmem:[%s1 + $0xc4] sm:$0xf]
    %v163 = vld [vmem:[%s1 + $0xc8] sm:$0xf]
    %v164 = vld [vmem:[%s1 + $0xcc] sm:$0xf]
    %v165 = vld [vmem:[%s1 + $0xd0] sm:$0xf]
    %v166 = vld [vmem:[%s1 + $0xd4] sm:$0xf]
    %v167 = vld [vmem:[%s1 + $0xd8] sm:$0xf]
    %v168 = vld [vmem:[%s1 + $0xdc] sm:$0xf]
    %v169 = vld [vmem:[%s1 + $0xe0] sm:$0xf]
    %v170 = vld [vmem:[%s1 + $0xe4] sm:$0xf]
    %v171 = vld [vmem:[%s1 + $0xe8] sm:$0xf]
    %v172 = vld [vmem:[%s1 + $0xec] sm:$0xf]
    %v173 = vld [vmem:[%s1 + $0xf0] sm:$0xf]
    %v174 = vld [vmem:[%s1 + $0xf4] sm:$0xf]
    %v175 = vld [vmem:[%s1 + $0xf8] sm:$0xf]
    %v176 = vld [vmem:[%s1 + $0xfc] sm:$0xf]
    %v177 = vld [vmem:[%s2] sm:$0x1]
    %v179 = vlaneseq
    %v180 = vshrl.u32 %v179, 7
    %v181 = vsub.s32 0, %v180
    %v182 = vrot.slane %v177, %v181
    %v248 = vunpack.c.l.b16 %v113
    %v249 = vunpack.c.l.b16 %v114
    %v250 = vunpack.c.l.b16 %v115
    %v251 = vunpack.c.l.b16 %v116
    %v252 = vunpack.c.l.b16 %v117
    %v253 = vunpack.c.l.b16 %v118
    %v254 = vunpack.c.l.b16 %v119
    %v255 = vunpack.c.l.b16 %v120
    %v256 = vunpack.c.l.b16 %v121
    %v257 = vunpack.c.l.b16 %v122
    %v258 = vunpack.c.l.b16 %v123
    %v259 = vunpack.c.l.b16 %v124
    %v260 = vunpack.c.l.b16 %v125
    %v261 = vunpack.c.l.b16 %v126
    %v262 = vunpack.c.l.b16 %v127
    %v263 = vunpack.c.l.b16 %v128
    %v264 = vunpack.c.l.b16 %v129
    %v265 = vunpack.c.l.b16 %v130
    %v266 = vunpack.c.l.b16 %v131
    %v267 = vunpack.c.l.b16 %v132
    %v268 = vunpack.c.l.b16 %v133
    %v269 = vunpack.c.l.b16 %v134
    %v270 = vunpack.c.l.b16 %v135
    %v271 = vunpack.c.l.b16 %v136
    %v272 = vunpack.c.l.b16 %v137
    %v273 = vunpack.c.l.b16 %v138
    %v274 = vunpack.c.l.b16 %v139
    %v275 = vunpack.c.l.b16 %v140
    %v276 = vunpack.c.l.b16 %v141
    %v277 = vunpack.c.l.b16 %v142
    %v278 = vunpack.c.l.b16 %v143
    %v279 = vunpack.c.l.b16 %v144
    %v280 = vunpack.c.l.b16 %v145
    %v281 = vunpack.c.l.b16 %v146
    %v282 = vunpack.c.l.b16 %v147
    %v283 = vunpack.c.l.b16 %v148
    %v284 = vunpack.c.l.b16 %v149
    %v285 = vunpack.c.l.b16 %v150
    %v286 = vunpack.c.l.b16 %v151
    %v287 = vunpack.c.l.b16 %v152
    %v288 = vunpack.c.l.b16 %v153
    %v289 = vunpack.c.l.b16 %v154
    %v290 = vunpack.c.l.b16 %v155
    %v291 = vunpack.c.l.b16 %v156
    %v292 = vunpack.c.l.b16 %v157
    %v293 = vunpack.c.l.b16 %v158
    %v294 = vunpack.c.l.b16 %v159
    %v295 = vunpack.c.l.b16 %v160
    %v296 = vunpack.c.l.b16 %v161
    %v297 = vunpack.c.l.b16 %v162
    %v298 = vunpack.c.l.b16 %v163
    %v299 = vunpack.c.l.b16 %v164
    %v300 = vunpack.c.l.b16 %v165
    %v301 = vunpack.c.l.b16 %v166
    %v302 = vunpack.c.l.b16 %v167
    %v303 = vunpack.c.l.b16 %v168
    %v304 = vunpack.c.l.b16 %v169
    %v305 = vunpack.c.l.b16 %v170
    %v306 = vunpack.c.l.b16 %v171
    %v307 = vunpack.c.l.b16 %v172
    %v308 = vunpack.c.l.b16 %v173
    %v309 = vunpack.c.l.b16 %v174
    %v310 = vunpack.c.l.b16 %v175
    %v311 = vunpack.c.l.b16 %v176
    %v312 = vpack.c.b16 %v249, %v248
    %v313 = vpack.c.b16 %v251, %v250
    %v314 = vpack.c.b16 %v253, %v252
    %v315 = vpack.c.b16 %v255, %v254
    %v316 = vpack.c.b16 %v257, %v256
    %v317 = vpack.c.b16 %v259, %v258
    %v318 = vpack.c.b16 %v261, %v260
    %v319 = vpack.c.b16 %v263, %v262
    %v320 = vpack.c.b16 %v265, %v264
    %v321 = vpack.c.b16 %v267, %v266
    %v322 = vpack.c.b16 %v269, %v268
    %v323 = vpack.c.b16 %v271, %v270
    %v324 = vpack.c.b16 %v273, %v272
    %v325 = vpack.c.b16 %v275, %v274
    %v326 = vpack.c.b16 %v277, %v276
    %v327 = vpack.c.b16 %v279, %v278
    %v328 = vpack.c.b16 %v281, %v280
    %v329 = vpack.c.b16 %v283, %v282
    %v330 = vpack.c.b16 %v285, %v284
    %v331 = vpack.c.b16 %v287, %v286
    %v332 = vpack.c.b16 %v289, %v288
    %v333 = vpack.c.b16 %v291, %v290
    %v334 = vpack.c.b16 %v293, %v292
    %v335 = vpack.c.b16 %v295, %v294
    %v336 = vpack.c.b16 %v297, %v296
    %v337 = vpack.c.b16 %v299, %v298
    %v338 = vpack.c.b16 %v301, %v300
    %v339 = vpack.c.b16 %v303, %v302
    %v340 = vpack.c.b16 %v305, %v304
    %v341 = vpack.c.b16 %v307, %v306
    %v342 = vpack.c.b16 %v309, %v308
    %v343 = vpack.c.b16 %v311, %v310
    %376 = vmatprep.subr.bf16.mxu0 0
    %377 = vmatpush1.bf16.msra.mxu0 %v312
    %378 = vmatprep.subr.bf16.mxu0 0
    %379 = vmatpush1.bf16.msra.mxu0 %v313
    %380 = vmatprep.subr.bf16.mxu0 0
    %381 = vmatpush1.bf16.msra.mxu0 %v314
    %382 = vmatprep.subr.bf16.mxu0 0
    %383 = vmatpush1.bf16.msra.mxu0 %v315
    %384 = vmatprep.subr.bf16.mxu0 0
    %385 = vmatpush1.bf16.msra.mxu0 %v316
    %386 = vmatprep.subr.bf16.mxu0 0
    %387 = vmatpush1.bf16.msra.mxu0 %v317
    %388 = vmatprep.subr.bf16.mxu0 0
    %389 = vmatpush1.bf16.msra.mxu0 %v318
    %390 = vmatprep.subr.bf16.mxu0 0
    %391 = vmatpush1.bf16.msra.mxu0 %v319
    %392 = vmatprep.subr.bf16.mxu0 0
    %393 = vmatpush1.bf16.msra.mxu0 %v320
    %394 = vmatprep.subr.bf16.mxu0 0
    %395 = vmatpush1.bf16.msra.mxu0 %v321
    %396 = vmatprep.subr.bf16.mxu0 0
    %397 = vmatpush1.bf16.msra.mxu0 %v322
    %398 = vmatprep.subr.bf16.mxu0 0
    %399 = vmatpush1.bf16.msra.mxu0 %v323
    %400 = vmatprep.subr.bf16.mxu0 0
    %401 = vmatpush1.bf16.msra.mxu0 %v324
    %402 = vmatprep.subr.bf16.mxu0 0
    %403 = vmatpush1.bf16.msra.mxu0 %v325
    %404 = vmatprep.subr.bf16.mxu0 0
    %405 = vmatpush1.bf16.msra.mxu0 %v326
    %406 = vmatprep.subr.bf16.mxu0 0
    %407 = vmatpush1.bf16.msra.mxu0 %v327
    %408 = vmatprep.mubr.bf16.mxu0 %v86
    %409 = vmatmul.mubr.bf16.gmra.mrb[0].mxu0 %v85
    %v410 = vpop.f32.mrb[0].mxu0
    %v411 = vadd.f32 %v182, %v410
    %v412 = vpop.f32.mrb[0].mxu0
    %v413 = vpop.f32.mrb[0].mxu0
    %v414 = vadd.f32 %v182, %v413
    %v415 = vpop.f32.mrb[0].mxu0
    %416 = vmatprep.mubr.bf16.mxu0 %v88
    %417 = vmatmul.mubr.bf16.gmra.mrb[0].mxu0 %v87
    %v418 = vpop.f32.mrb[0].mxu0
    %v419 = vadd.f32 %v182, %v418
    %v420 = vpop.f32.mrb[0].mxu0
    %v421 = vpop.f32.mrb[0].mxu0
    %v422 = vadd.f32 %v182, %v421
    %v423 = vpop.f32.mrb[0].mxu0
    %424 = vdwg.mxu0
    %425 = vmatprep.subr.bf16.mxu0 0
    %426 = vmatpush1.bf16.msra.mxu0 %v328
    %427 = vmatprep.subr.bf16.mxu0 0
    %428 = vmatpush1.bf16.msra.mxu0 %v329
    %429 = vmatprep.subr.bf16.mxu0 0
    %430 = vmatpush1.bf16.msra.mxu0 %v330
    %431 = vmatprep.subr.bf16.mxu0 0
    %432 = vmatpush1.bf16.msra.mxu0 %v331
    %433 = vmatprep.subr.bf16.mxu0 0
    %434 = vmatpush1.bf16.msra.mxu0 %v332
    %435 = vmatprep.subr.bf16.mxu0 0
    %436 = vmatpush1.bf16.msra.mxu0 %v333
    %437 = vmatprep.subr.bf16.mxu0 0
    %438 = vmatpush1.bf16.msra.mxu0 %v334
    %439 = vmatprep.subr.bf16.mxu0 0
    %440 = vmatpush1.bf16.msra.mxu0 %v335
    %441 = vmatprep.subr.bf16.mxu0 0
    %442 = vmatpush1.bf16.msra.mxu0 %v336
    %443 = vmatprep.subr.bf16.mxu0 0
    %444 = vmatpush1.bf16.msra.mxu0 %v337
    %445 = vmatprep.subr.bf16.mxu0 0
    %446 = vmatpush1.bf16.msra.mxu0 %v338
    %447 = vmatprep.subr.bf16.mxu0 0
    %448 = vmatpush1.bf16.msra.mxu0 %v339
    %449 = vmatprep.subr.bf16.mxu0 0
    %450 = vmatpush1.bf16.msra.mxu0 %v340
    %451 = vmatprep.subr.bf16.mxu0 0
    %452 = vmatpush1.bf16.msra.mxu0 %v341
    %453 = vmatprep.subr.bf16.mxu0 0
    %454 = vmatpush1.bf16.msra.mxu0 %v342
    %455 = vmatprep.subr.bf16.mxu0 0
    %456 = vmatpush1.bf16.msra.mxu0 %v343
    %457 = vmatprep.mubr.bf16.mxu0 %v106
    %458 = vmatmul.mubr.bf16.gmra.mrb[0].mxu0 %v105
    %v459 = vpop.f32.mrb[0].mxu0
    %v460 = vadd.f32 %v411, %v459
    %v461 = vpop.f32.mrb[0].mxu0
    %v462 = vpop.f32.mrb[0].mxu0
    %v463 = vadd.f32 %v414, %v462
    %v464 = vpop.f32.mrb[0].mxu0
    %465 = vmatprep.mubr.bf16.mxu0 %v108
    %466 = vmatmul.mubr.bf16.gmra.mrb[0].mxu0 %v107
    %v467 = vpop.f32.mrb[0].mxu0
    %v468 = vadd.f32 %v419, %v467
    %v469 = vpop.f32.mrb[0].mxu0
    %v470 = vpop.f32.mrb[0].mxu0
    %v471 = vadd.f32 %v422, %v470
    %v472 = vpop.f32.mrb[0].mxu0
    %473 = vdwg.mxu0
    %v474 = vpack.c.bf16 %v463, %v460
    %v475 = vpack.c.bf16 %v471, %v468
    %v476 = vld [vmem:[%s3] sm:$0xff]
    %v477 = vld [vmem:[%s3 + $0x8] sm:$0xf]
    %v478 = vld [vmem:[%s3 + $0xc] sm:$0xff]
    %v479 = vld [vmem:[%s3 + $0x14] sm:$0xf]
    %v480 = vld [vmem:[%s3 + $0x18] sm:$0xff]
    %v481 = vld [vmem:[%s3 + $0x20] sm:$0xf]
    %v482 = vld [vmem:[%s3 + $0x24] sm:$0xff]
    %v483 = vld [vmem:[%s3 + $0x2c] sm:$0xf]
    %v484 = vld [vmem:[%s3 + $0x30] sm:$0xff]
    %v485 = vld [vmem:[%s3 + $0x38] sm:$0xf]
    %v486 = vld [vmem:[%s3 + $0x3c] sm:$0xff]
    %v487 = vld [vmem:[%s3 + $0x44] sm:$0xf]
    %v488 = vld [vmem:[%s3 + $0x48] sm:$0xff]
    %v489 = vld [vmem:[%s3 + $0x50] sm:$0xf]
    %v490 = vld [vmem:[%s3 + $0x54] sm:$0xff]
    %v491 = vld [vmem:[%s3 + $0x5c] sm:$0xf]
    %v508 = vunpack.c.l.b16 %v476
    %v509 = vunpack.c.h.b16 %v476
    %v510 = vunpack.c.l.b16 %v477
    %v511 = vunpack.c.l.b16 %v478
    %v512 = vunpack.c.h.b16 %v478
    %v513 = vunpack.c.l.b16 %v479
    %v514 = vunpack.c.l.b16 %v480
    %v515 = vunpack.c.h.b16 %v480
    %v516 = vunpack.c.l.b16 %v481
    %v517 = vunpack.c.l.b16 %v482
    %v518 = vunpack.c.h.b16 %v482
    %v519 = vunpack.c.l.b16 %v483
    %v520 = vunpack.c.l.b16 %v484
    %v521 = vunpack.c.h.b16 %v484
    %v522 = vunpack.c.l.b16 %v485
    %v523 = vunpack.c.l.b16 %v486
    %v524 = vunpack.c.h.b16 %v486
    %v525 = vunpack.c.l.b16 %v487
    %v526 = vunpack.c.l.b16 %v488
    %v527 = vunpack.c.h.b16 %v488
    %v528 = vunpack.c.l.b16 %v489
    %v529 = vunpack.c.l.b16 %v490
    %v530 = vunpack.c.h.b16 %v490
    %v531 = vunpack.c.l.b16 %v491
    %v532 = vpack.c.b16 %v511, %v508
    %v533 = vpack.c.b16 %v512, %v509
    %v534 = vpack.c.b16 %v513, %v510
    %v535 = vpack.c.b16 %v517, %v514
    %v536 = vpack.c.b16 %v518, %v515
    %v537 = vpack.c.b16 %v519, %v516
    %v538 = vpack.c.b16 %v523, %v520
    %v539 = vpack.c.b16 %v524, %v521
    %v540 = vpack.c.b16 %v525, %v522
    %v541 = vpack.c.b16 %v529, %v526
    %v542 = vpack.c.b16 %v530, %v527
    %v543 = vpack.c.b16 %v531, %v528
    %vm556 = vcmask 523264
    %v558 = vsel %vm556, %v474, 0
    %v561 = vsel %vm556, %v475, 0
    %563 = vmatprep.subr.bf16.mxu0 %v533
    %564 = vmatpush1.bf16.msra.mxu0 %v532
    %565 = vmatprep.subr.bf16.mxu0 %v536
    %566 = vmatpush1.bf16.msra.mxu0 %v535
    %567 = vmatprep.subr.bf16.mxu0 %v539
    %568 = vmatpush1.bf16.msra.mxu0 %v538
    %569 = vmatprep.subr.bf16.mxu0 %v542
    %570 = vmatpush1.bf16.msra.mxu0 %v541
    %571 = vmatprep.subr.bf16.mxu0 0
    %572 = vmatpush1.bf16.msra.mxu0 0
    %573 = vmatprep.subr.bf16.mxu0 0
    %574 = vmatpush1.bf16.msra.mxu0 0
    %575 = vmatprep.subr.bf16.mxu0 0
    %576 = vmatpush1.bf16.msra.mxu0 0
    %577 = vmatprep.subr.bf16.mxu0 0
    %578 = vmatpush1.bf16.msra.mxu0 0
    %579 = vmatprep.subr.bf16.mxu0 0
    %580 = vmatpush1.bf16.msra.mxu0 0
    %581 = vmatprep.subr.bf16.mxu0 0
    %582 = vmatpush1.bf16.msra.mxu0 0
    %583 = vmatprep.subr.bf16.mxu0 0
    %584 = vmatpush1.bf16.msra.mxu0 0
    %585 = vmatprep.subr.bf16.mxu0 0
    %586 = vmatpush1.bf16.msra.mxu0 0
    %587 = vmatprep.subr.bf16.mxu0 0
    %588 = vmatpush1.bf16.msra.mxu0 0
    %589 = vmatprep.subr.bf16.mxu0 0
    %590 = vmatpush1.bf16.msra.mxu0 0
    %591 = vmatprep.subr.bf16.mxu0 0
    %592 = vmatpush1.bf16.msra.mxu0 0
    %593 = vmatprep.subr.bf16.mxu0 0
    %594 = vmatpush1.bf16.msra.mxu0 0
    %595 = vmatprep.mubr.bf16.mxu0 0
    %596 = vmatmul.mubr.bf16.gmra.mrb[0].mxu0 %v558
    %v597 = vpop.f32.mrb[0].mxu0
    %v598 = vadd.f32 0.0, %v597
    %v599 = vpop.f32.mrb[0].mxu0
    %v600 = vadd.f32 0.0, %v599
    %v601 = vpop.f32.mrb[0].mxu0
    %v602 = vadd.f32 0.0, %v601
    %v603 = vpop.f32.mrb[0].mxu0
    %v604 = vadd.f32 0.0, %v603
    %605 = vmatprep.mubr.bf16.mxu0 0
    %606 = vmatmul.mubr.bf16.gmra.mrb[0].mxu0 %v561
    %v607 = vpop.f32.mrb[0].mxu0
    %v608 = vadd.f32 0.0, %v607
    %v609 = vpop.f32.mrb[0].mxu0
    %v610 = vadd.f32 0.0, %v609
    %v611 = vpop.f32.mrb[0].mxu0
    %v612 = vadd.f32 0.0, %v611
    %v613 = vpop.f32.mrb[0].mxu0
    %v614 = vadd.f32 0.0, %v613
    %615 = vdwg.mxu0
    %616 = vmatprep.subr.bf16.mxu0 0
    %617 = vmatpush1.bf16.msra.mxu0 %v534
    %618 = vmatprep.subr.bf16.mxu0 0
    %619 = vmatpush1.bf16.msra.mxu0 %v537
    %620 = vmatprep.subr.bf16.mxu0 0
    %621 = vmatpush1.bf16.msra.mxu0 %v540
    %622 = vmatprep.subr.bf16.mxu0 0
    %623 = vmatpush1.bf16.msra.mxu0 %v543
    %624 = vmatprep.subr.bf16.mxu0 0
    %625 = vmatpush1.bf16.msra.mxu0 0
    %626 = vmatprep.subr.bf16.mxu0 0
    %627 = vmatpush1.bf16.msra.mxu0 0
    %628 = vmatprep.subr.bf16.mxu0 0
    %629 = vmatpush1.bf16.msra.mxu0 0
    %630 = vmatprep.subr.bf16.mxu0 0
    %631 = vmatpush1.bf16.msra.mxu0 0
    %632 = vmatprep.subr.bf16.mxu0 0
    %633 = vmatpush1.bf16.msra.mxu0 0
    %634 = vmatprep.subr.bf16.mxu0 0
    %635 = vmatpush1.bf16.msra.mxu0 0
    %636 = vmatprep.subr.bf16.mxu0 0
    %637 = vmatpush1.bf16.msra.mxu0 0
    %638 = vmatprep.subr.bf16.mxu0 0
    %639 = vmatpush1.bf16.msra.mxu0 0
    %640 = vmatprep.subr.bf16.mxu0 0
    %641 = vmatpush1.bf16.msra.mxu0 0
    %642 = vmatprep.subr.bf16.mxu0 0
    %643 = vmatpush1.bf16.msra.mxu0 0
    %644 = vmatprep.subr.bf16.mxu0 0
    %645 = vmatpush1.bf16.msra.mxu0 0
    %646 = vmatprep.subr.bf16.mxu0 0
    %647 = vmatpush1.bf16.msra.mxu0 0
    %648 = vmatprep.mubr.bf16.mxu0 0
    %649 = vmatmul.mubr.bf16.gmra.mrb[0].mxu0 %v558
    %v650 = vpop.f32.mrb[0].mxu0
    %v651 = vadd.f32 0.0, %v650
    %v652 = vpop.f32.mrb[0].mxu0
    %v653 = vpop.f32.mrb[0].mxu0
    %v654 = vadd.f32 0.0, %v653
    %v655 = vpop.f32.mrb[0].mxu0
    %656 = vmatprep.mubr.bf16.mxu0 0
    %657 = vmatmul.mubr.bf16.gmra.mrb[0].mxu0 %v561
    %v658 = vpop.f32.mrb[0].mxu0
    %v659 = vadd.f32 0.0, %v658
    %v660 = vpop.f32.mrb[0].mxu0
    %v661 = vpop.f32.mrb[0].mxu0
    %v662 = vadd.f32 0.0, %v661
    %v663 = vpop.f32.mrb[0].mxu0
    %664 = vdwg.mxu0
    %v665 = vld [vmem:[%s4] sm:$0xff]
    %v666 = vld [vmem:[%s4 + $0x8] sm:$0xff]
    %v667 = vld [vmem:[%s4 + $0x10] sm:$0xff]
    %v668 = vadd.f32 %v598, %v665
    %v669 = vadd.f32 %v600, %v666
    %v670 = vadd.f32 %v651, %v667
    %v671 = vadd.f32 %v602, %v665
    %v672 = vadd.f32 %v604, %v666
    %v673 = vadd.f32 %v654, %v667
    %v674 = vadd.f32 %v608, %v665
    %v675 = vadd.f32 %v610, %v666
    %v676 = vadd.f32 %v659, %v667
    %v677 = vadd.f32 %v612, %v665
    %v678 = vadd.f32 %v614, %v666
    %v679 = vadd.f32 %v662, %v667
    %684 = vrot.lane.b32.xlu0 %v669, 64
    %v685 = vpop.permute.xlu0 %684
    %686 = vrot.lane.b32.xlu0 %v672, 64
    %v687 = vpop.permute.xlu0 %686
    %688 = vrot.lane.b32.xlu0 %v675, 64
    %v689 = vpop.permute.xlu0 %688
    %690 = vrot.lane.b32.xlu0 %v678, 64
    %v691 = vpop.permute.xlu0 %690
    %696 = vrot.lane.b32.xlu0 %v670, 64
    %v697 = vpop.permute.xlu0 %696
    %698 = vrot.lane.b32.xlu0 %v673, 64
    %v699 = vpop.permute.xlu0 %698
    %700 = vrot.lane.b32.xlu0 %v676, 64
    %v701 = vpop.permute.xlu0 %700
    %702 = vrot.lane.b32.xlu0 %v679, 64
    %v703 = vpop.permute.xlu0 %702
    %709 = vrot.lane.b32.xlu0 %v668, 64
    %v710 = vpop.permute.xlu0 %709
    %v711 = vsel %vm556, %v668, 0
    %v713 = vsel %vm556, %v710, 0
    %715 = vmatprep.subr.mxu0 0.0
    %716 = vmatpush1.xpose.msra.mxu0 %v713
    %717 = vmatprep.subr.mxu0 0.0
    %718 = vmatpush1.xpose.msra.mxu0 0.0
    %719 = vmatprep.subr.mxu0 0.0
    %720 = vmatpush1.xpose.msra.mxu0 0.0
    %721 = vmatprep.subr.mxu0 0.0
    %722 = vmatpush1.xpose.msra.mxu0 0.0
    %723 = vmatprep.subr.mxu0 0.0
    %724 = vmatpush1.xpose.msra.mxu0 0.0
    %725 = vmatprep.subr.mxu0 0.0
    %726 = vmatpush1.xpose.msra.mxu0 0.0
    %727 = vmatprep.subr.mxu0 0.0
    %728 = vmatpush1.xpose.msra.mxu0 0.0
    %729 = vmatprep.subr.mxu0 0.0
    %730 = vmatpush1.xpose.msra.mxu0 0.0
    %731 = vmatprep.subr.mxu0 0.0
    %732 = vmatpush1.xpose.msra.mxu0 0.0
    %733 = vmatprep.subr.mxu0 0.0
    %734 = vmatpush1.xpose.msra.mxu0 0.0
    %735 = vmatprep.subr.mxu0 0.0
    %736 = vmatpush1.xpose.msra.mxu0 0.0
    %737 = vmatprep.subr.mxu0 0.0
    %738 = vmatpush1.xpose.msra.mxu0 0.0
    %739 = vmatprep.subr.mxu0 0.0
    %740 = vmatpush1.xpose.msra.mxu0 0.0
    %741 = vmatprep.subr.mxu0 0.0
    %742 = vmatpush1.xpose.msra.mxu0 0.0
    %743 = vmatprep.subr.mxu0 0.0
    %744 = vmatpush1.xpose.msra.mxu0 0.0
    %745 = vmatprep.subr.mxu0 0.0
    %746 = vmatpush1.xpose.msra.mxu0 0.0
    %747 = vmatprep.subr.mxu0 0.0
    %748 = vmatpush1.xpose.msra.mxu0 0.0
    %749 = vmatprep.subr.mxu0 0.0
    %750 = vmatpush1.xpose.msra.mxu0 0.0
    %751 = vmatprep.subr.mxu0 0.0
    %752 = vmatpush1.xpose.msra.mxu0 0.0
    %753 = vmatprep.subr.mxu0 0.0
    %754 = vmatpush1.xpose.msra.mxu0 0.0
    %755 = vmatprep.subr.mxu0 0.0
    %756 = vmatpush1.xpose.msra.mxu0 0.0
    %757 = vmatprep.subr.mxu0 0.0
    %758 = vmatpush1.xpose.msra.mxu0 0.0
    %759 = vmatprep.subr.mxu0 0.0
    %760 = vmatpush1.xpose.msra.mxu0 0.0
    %761 = vmatprep.subr.mxu0 0.0
    %762 = vmatpush1.xpose.msra.mxu0 0.0
    %763 = vmatprep.subr.mxu0 0.0
    %764 = vmatpush1.xpose.msra.mxu0 0.0
    %765 = vmatprep.subr.mxu0 0.0
    %766 = vmatpush1.xpose.msra.mxu0 0.0
    %767 = vmatprep.subr.mxu0 0.0
    %768 = vmatpush1.xpose.msra.mxu0 0.0
    %769 = vmatprep.subr.mxu0 0.0
    %770 = vmatpush1.xpose.msra.mxu0 0.0
    %771 = vmatprep.subr.mxu0 0.0
    %772 = vmatpush1.xpose.msra.mxu0 0.0
    %773 = vmatprep.subr.mxu0 0.0
    %774 = vmatpush1.xpose.msra.mxu0 0.0
    %775 = vmatprep.subr.mxu0 0.0
    %776 = vmatpush1.xpose.msra.mxu0 0.0
    %777 = vmatprep.subr.mxu0 0.0
    %778 = vmatpush1.xpose.msra.mxu0 0.0
    %779 = vmatprep.mubr.f32.mxu0 0.0
    %780 = vmatmul.mubr.f32.gmra.mrb[0].mxu0 %v711
    %v781 = vpop.f32.mrb[0].mxu0
    %v782 = vadd.f32 0.0, %v781
    %v783 = vpop.f32.mrb[0].mxu0
    %784 = vdwg.mxu0
    %786 = vrot.lane.b32.xlu0 %v671, 64
    %v787 = vpop.permute.xlu0 %786
    %v788 = vsel %vm556, %v671, 0
    %v790 = vsel %vm556, %v787, 0
    %792 = vmatprep.subr.mxu0 0.0
    %793 = vmatpush1.xpose.msra.mxu0 %v790
    %794 = vmatprep.subr.mxu0 0.0
    %795 = vmatpush1.xpose.msra.mxu0 0.0
    %796 = vmatprep.subr.mxu0 0.0
    %797 = vmatpush1.xpose.msra.mxu0 0.0
    %798 = vmatprep.subr.mxu0 0.0
    %799 = vmatpush1.xpose.msra.mxu0 0.0
    %800 = vmatprep.subr.mxu0 0.0
    %801 = vmatpush1.xpose.msra.mxu0 0.0
    %802 = vmatprep.subr.mxu0 0.0
    %803 = vmatpush1.xpose.msra.mxu0 0.0
    %804 = vmatprep.subr.mxu0 0.0
    %805 = vmatpush1.xpose.msra.mxu0 0.0
    %806 = vmatprep.subr.mxu0 0.0
    %807 = vmatpush1.xpose.msra.mxu0 0.0
    %808 = vmatprep.subr.mxu0 0.0
    %809 = vmatpush1.xpose.msra.mxu0 0.0
    %810 = vmatprep.subr.mxu0 0.0
    %811 = vmatpush1.xpose.msra.mxu0 0.0
    %812 = vmatprep.subr.mxu0 0.0
    %813 = vmatpush1.xpose.msra.mxu0 0.0
    %814 = vmatprep.subr.mxu0 0.0
    %815 = vmatpush1.xpose.msra.mxu0 0.0
    %816 = vmatprep.subr.mxu0 0.0
    %817 = vmatpush1.xpose.msra.mxu0 0.0
    %818 = vmatprep.subr.mxu0 0.0
    %819 = vmatpush1.xpose.msra.mxu0 0.0
    %820 = vmatprep.subr.mxu0 0.0
    %821 = vmatpush1.xpose.msra.mxu0 0.0
    %822 = vmatprep.subr.mxu0 0.0
    %823 = vmatpush1.xpose.msra.mxu0 0.0
    %824 = vmatprep.subr.mxu0 0.0
    %825 = vmatpush1.xpose.msra.mxu0 0.0
    %826 = vmatprep.subr.mxu0 0.0
    %827 = vmatpush1.xpose.msra.mxu0 0.0
    %828 = vmatprep.subr.mxu0 0.0
    %829 = vmatpush1.xpose.msra.mxu0 0.0
    %830 = vmatprep.subr.mxu0 0.0
    %831 = vmatpush1.xpose.msra.mxu0 0.0
    %832 = vmatprep.subr.mxu0 0.0
    %833 = vmatpush1.xpose.msra.mxu0 0.0
    %834 = vmatprep.subr.mxu0 0.0
    %835 = vmatpush1.xpose.msra.mxu0 0.0
    %836 = vmatprep.subr.mxu0 0.0
    %837 = vmatpush1.xpose.msra.mxu0 0.0
    %838 = vmatprep.subr.mxu0 0.0
    %839 = vmatpush1.xpose.msra.mxu0 0.0
    %840 = vmatprep.subr.mxu0 0.0
    %841 = vmatpush1.xpose.msra.mxu0 0.0
    %842 = vmatprep.subr.mxu0 0.0
    %843 = vmatpush1.xpose.msra.mxu0 0.0
    %844 = vmatprep.subr.mxu0 0.0
    %845 = vmatpush1.xpose.msra.mxu0 0.0
    %846 = vmatprep.subr.mxu0 0.0
    %847 = vmatpush1.xpose.msra.mxu0 0.0
    %848 = vmatprep.subr.mxu0 0.0
    %849 = vmatpush1.xpose.msra.mxu0 0.0
    %850 = vmatprep.subr.mxu0 0.0
    %851 = vmatpush1.xpose.msra.mxu0 0.0
    %852 = vmatprep.subr.mxu0 0.0
    %853 = vmatpush1.xpose.msra.mxu0 0.0
    %854 = vmatprep.subr.mxu0 0.0
    %855 = vmatpush1.xpose.msra.mxu0 0.0
    %856 = vmatprep.mubr.f32.mxu0 0.0
    %857 = vmatmul.mubr.f32.gmra.mrb[0].mxu0 %v788
    %v858 = vpop.f32.mrb[0].mxu0
    %v859 = vadd.f32 0.0, %v858
    %v860 = vpop.f32.mrb[0].mxu0
    %861 = vdwg.mxu0
    %863 = vrot.lane.b32.xlu0 %v674, 64
    %v864 = vpop.permute.xlu0 %863
    %v865 = vsel %vm556, %v674, 0
    %v867 = vsel %vm556, %v864, 0
    %869 = vmatprep.subr.mxu0 0.0
    %870 = vmatpush1.xpose.msra.mxu0 %v867
    %871 = vmatprep.subr.mxu0 0.0
    %872 = vmatpush1.xpose.msra.mxu0 0.0
    %873 = vmatprep.subr.mxu0 0.0
    %874 = vmatpush1.xpose.msra.mxu0 0.0
    %875 = vmatprep.subr.mxu0 0.0
    %876 = vmatpush1.xpose.msra.mxu0 0.0
    %877 = vmatprep.subr.mxu0 0.0
    %878 = vmatpush1.xpose.msra.mxu0 0.0
    %879 = vmatprep.subr.mxu0 0.0
    %880 = vmatpush1.xpose.msra.mxu0 0.0
    %881 = vmatprep.subr.mxu0 0.0
    %882 = vmatpush1.xpose.msra.mxu0 0.0
    %883 = vmatprep.subr.mxu0 0.0
    %884 = vmatpush1.xpose.msra.mxu0 0.0
    %885 = vmatprep.subr.mxu0 0.0
    %886 = vmatpush1.xpose.msra.mxu0 0.0
    %887 = vmatprep.subr.mxu0 0.0
    %888 = vmatpush1.xpose.msra.mxu0 0.0
    %889 = vmatprep.subr.mxu0 0.0
    %890 = vmatpush1.xpose.msra.mxu0 0.0
    %891 = vmatprep.subr.mxu0 0.0
    %892 = vmatpush1.xpose.msra.mxu0 0.0
    %893 = vmatprep.subr.mxu0 0.0
    %894 = vmatpush1.xpose.msra.mxu0 0.0
    %895 = vmatprep.subr.mxu0 0.0
    %896 = vmatpush1.xpose.msra.mxu0 0.0
    %897 = vmatprep.subr.mxu0 0.0
    %898 = vmatpush1.xpose.msra.mxu0 0.0
    %899 = vmatprep.subr.mxu0 0.0
    %900 = vmatpush1.xpose.msra.mxu0 0.0
    %901 = vmatprep.subr.mxu0 0.0
    %902 = vmatpush1.xpose.msra.mxu0 0.0
    %903 = vmatprep.subr.mxu0 0.0
    %904 = vmatpush1.xpose.msra.mxu0 0.0
    %905 = vmatprep.subr.mxu0 0.0
    %906 = vmatpush1.xpose.msra.mxu0 0.0
    %907 = vmatprep.subr.mxu0 0.0
    %908 = vmatpush1.xpose.msra.mxu0 0.0
    %909 = vmatprep.subr.mxu0 0.0
    %910 = vmatpush1.xpose.msra.mxu0 0.0
    %911 = vmatprep.subr.mxu0 0.0
    %912 = vmatpush1.xpose.msra.mxu0 0.0
    %913 = vmatprep.subr.mxu0 0.0
    %914 = vmatpush1.xpose.msra.mxu0 0.0
    %915 = vmatprep.subr.mxu0 0.0
    %916 = vmatpush1.xpose.msra.mxu0 0.0
    %917 = vmatprep.subr.mxu0 0.0
    %918 = vmatpush1.xpose.msra.mxu0 0.0
    %919 = vmatprep.subr.mxu0 0.0
    %920 = vmatpush1.xpose.msra.mxu0 0.0
    %921 = vmatprep.subr.mxu0 0.0
    %922 = vmatpush1.xpose.msra.mxu0 0.0
    %923 = vmatprep.subr.mxu0 0.0
    %924 = vmatpush1.xpose.msra.mxu0 0.0
    %925 = vmatprep.subr.mxu0 0.0
    %926 = vmatpush1.xpose.msra.mxu0 0.0
    %927 = vmatprep.subr.mxu0 0.0
    %928 = vmatpush1.xpose.msra.mxu0 0.0
    %929 = vmatprep.subr.mxu0 0.0
    %930 = vmatpush1.xpose.msra.mxu0 0.0
    %931 = vmatprep.subr.mxu0 0.0
    %932 = vmatpush1.xpose.msra.mxu0 0.0
    %933 = vmatprep.mubr.f32.mxu0 0.0
    %934 = vmatmul.mubr.f32.gmra.mrb[0].mxu0 %v865
    %v935 = vpop.f32.mrb[0].mxu0
    %v936 = vadd.f32 0.0, %v935
    %v937 = vpop.f32.mrb[0].mxu0
    %938 = vdwg.mxu0
    %940 = vrot.lane.b32.xlu0 %v677, 64
    %v941 = vpop.permute.xlu0 %940
    %v942 = vsel %vm556, %v677, 0
    %v944 = vsel %vm556, %v941, 0
    %946 = vmatprep.subr.mxu0 0.0
    %947 = vmatpush1.xpose.msra.mxu0 %v944
    %948 = vmatprep.subr.mxu0 0.0
    %949 = vmatpush1.xpose.msra.mxu0 0.0
    %950 = vmatprep.subr.mxu0 0.0
    %951 = vmatpush1.xpose.msra.mxu0 0.0
    %952 = vmatprep.subr.mxu0 0.0
    %953 = vmatpush1.xpose.msra.mxu0 0.0
    %954 = vmatprep.subr.mxu0 0.0
    %955 = vmatpush1.xpose.msra.mxu0 0.0
    %956 = vmatprep.subr.mxu0 0.0
    %957 = vmatpush1.xpose.msra.mxu0 0.0
    %958 = vmatprep.subr.mxu0 0.0
    %959 = vmatpush1.xpose.msra.mxu0 0.0
    %960 = vmatprep.subr.mxu0 0.0
    %961 = vmatpush1.xpose.msra.mxu0 0.0
    %962 = vmatprep.subr.mxu0 0.0
    %963 = vmatpush1.xpose.msra.mxu0 0.0
    %964 = vmatprep.subr.mxu0 0.0
    %965 = vmatpush1.xpose.msra.mxu0 0.0
    %966 = vmatprep.subr.mxu0 0.0
    %967 = vmatpush1.xpose.msra.mxu0 0.0
    %968 = vmatprep.subr.mxu0 0.0
    %969 = vmatpush1.xpose.msra.mxu0 0.0
    %970 = vmatprep.subr.mxu0 0.0
    %971 = vmatpush1.xpose.msra.mxu0 0.0
    %972 = vmatprep.subr.mxu0 0.0
    %973 = vmatpush1.xpose.msra.mxu0 0.0
    %974 = vmatprep.subr.mxu0 0.0
    %975 = vmatpush1.xpose.msra.mxu0 0.0
    %976 = vmatprep.subr.mxu0 0.0
    %977 = vmatpush1.xpose.msra.mxu0 0.0
    %978 = vmatprep.subr.mxu0 0.0
    %979 = vmatpush1.xpose.msra.mxu0 0.0
    %980 = vmatprep.subr.mxu0 0.0
    %981 = vmatpush1.xpose.msra.mxu0 0.0
    %982 = vmatprep.subr.mxu0 0.0
    %983 = vmatpush1.xpose.msra.mxu0 0.0
    %984 = vmatprep.subr.mxu0 0.0
    %985 = vmatpush1.xpose.msra.mxu0 0.0
    %986 = vmatprep.subr.mxu0 0.0
    %987 = vmatpush1.xpose.msra.mxu0 0.0
    %988 = vmatprep.subr.mxu0 0.0
    %989 = vmatpush1.xpose.msra.mxu0 0.0
    %990 = vmatprep.subr.mxu0 0.0
    %991 = vmatpush1.xpose.msra.mxu0 0.0
    %992 = vmatprep.subr.mxu0 0.0
    %993 = vmatpush1.xpose.msra.mxu0 0.0
    %994 = vmatprep.subr.mxu0 0.0
    %995 = vmatpush1.xpose.msra.mxu0 0.0
    %996 = vmatprep.subr.mxu0 0.0
    %997 = vmatpush1.xpose.msra.mxu0 0.0
    %998 = vmatprep.subr.mxu0 0.0
    %999 = vmatpush1.xpose.msra.mxu0 0.0
    %1000 = vmatprep.subr.mxu0 0.0
    %1001 = vmatpush1.xpose.msra.mxu0 0.0
    %1002 = vmatprep.subr.mxu0 0.0
    %1003 = vmatpush1.xpose.msra.mxu0 0.0
    %1004 = vmatprep.subr.mxu0 0.0
    %1005 = vmatpush1.xpose.msra.mxu0 0.0
    %1006 = vmatprep.subr.mxu0 0.0
    %1007 = vmatpush1.xpose.msra.mxu0 0.0
    %1008 = vmatprep.subr.mxu0 0.0
    %1009 = vmatpush1.xpose.msra.mxu0 0.0
    %1010 = vmatprep.mubr.f32.mxu0 0.0
    %1011 = vmatmul.mubr.f32.gmra.mrb[0].mxu0 %v942
    %v1012 = vpop.f32.mrb[0].mxu0
    %v1013 = vadd.f32 0.0, %v1012
    %v1014 = vpop.f32.mrb[0].mxu0
    %1015 = vdwg.mxu0
    %1016 = vrot.lane.b32.xlu0 %v697, 64
    %v1017 = vpop.permute.xlu0 %1016
    %v1018 = vsel %vm556, %v685, 0
    %v1020 = vsel %vm556, %v1017, 0
    %1022 = vmatprep.subr.mxu0 0.0
    %1023 = vmatpush1.xpose.msra.mxu0 %v1020
    %1024 = vmatprep.subr.mxu0 0.0
    %1025 = vmatpush1.xpose.msra.mxu0 0.0
    %1026 = vmatprep.subr.mxu0 0.0
    %1027 = vmatpush1.xpose.msra.mxu0 0.0
    %1028 = vmatprep.subr.mxu0 0.0
    %1029 = vmatpush1.xpose.msra.mxu0 0.0
    %1030 = vmatprep.subr.mxu0 0.0
    %1031 = vmatpush1.xpose.msra.mxu0 0.0
    %1032 = vmatprep.subr.mxu0 0.0
    %1033 = vmatpush1.xpose.msra.mxu0 0.0
    %1034 = vmatprep.subr.mxu0 0.0
    %1035 = vmatpush1.xpose.msra.mxu0 0.0
    %1036 = vmatprep.subr.mxu0 0.0
    %1037 = vmatpush1.xpose.msra.mxu0 0.0
    %1038 = vmatprep.subr.mxu0 0.0
    %1039 = vmatpush1.xpose.msra.mxu0 0.0
    %1040 = vmatprep.subr.mxu0 0.0
    %1041 = vmatpush1.xpose.msra.mxu0 0.0
    %1042 = vmatprep.subr.mxu0 0.0
    %1043 = vmatpush1.xpose.msra.mxu0 0.0
    %1044 = vmatprep.subr.mxu0 0.0
    %1045 = vmatpush1.xpose.msra.mxu0 0.0
    %1046 = vmatprep.subr.mxu0 0.0
    %1047 = vmatpush1.xpose.msra.mxu0 0.0
    %1048 = vmatprep.subr.mxu0 0.0
    %1049 = vmatpush1.xpose.msra.mxu0 0.0
    %1050 = vmatprep.subr.mxu0 0.0
    %1051 = vmatpush1.xpose.msra.mxu0 0.0
    %1052 = vmatprep.subr.mxu0 0.0
    %1053 = vmatpush1.xpose.msra.mxu0 0.0
    %1054 = vmatprep.subr.mxu0 0.0
    %1055 = vmatpush1.xpose.msra.mxu0 0.0
    %1056 = vmatprep.subr.mxu0 0.0
    %1057 = vmatpush1.xpose.msra.mxu0 0.0
    %1058 = vmatprep.subr.mxu0 0.0
    %1059 = vmatpush1.xpose.msra.mxu0 0.0
    %1060 = vmatprep.subr.mxu0 0.0
    %1061 = vmatpush1.xpose.msra.mxu0 0.0
    %1062 = vmatprep.subr.mxu0 0.0
    %1063 = vmatpush1.xpose.msra.mxu0 0.0
    %1064 = vmatprep.subr.mxu0 0.0
    %1065 = vmatpush1.xpose.msra.mxu0 0.0
    %1066 = vmatprep.subr.mxu0 0.0
    %1067 = vmatpush1.xpose.msra.mxu0 0.0
    %1068 = vmatprep.subr.mxu0 0.0
    %1069 = vmatpush1.xpose.msra.mxu0 0.0
    %1070 = vmatprep.subr.mxu0 0.0
    %1071 = vmatpush1.xpose.msra.mxu0 0.0
    %1072 = vmatprep.subr.mxu0 0.0
    %1073 = vmatpush1.xpose.msra.mxu0 0.0
    %1074 = vmatprep.subr.mxu0 0.0
    %1075 = vmatpush1.xpose.msra.mxu0 0.0
    %1076 = vmatprep.subr.mxu0 0.0
    %1077 = vmatpush1.xpose.msra.mxu0 0.0
    %1078 = vmatprep.subr.mxu0 0.0
    %1079 = vmatpush1.xpose.msra.mxu0 0.0
    %1080 = vmatprep.subr.mxu0 0.0
    %1081 = vmatpush1.xpose.msra.mxu0 0.0
    %1082 = vmatprep.subr.mxu0 0.0
    %1083 = vmatpush1.xpose.msra.mxu0 0.0
    %1084 = vmatprep.subr.mxu0 0.0
    %1085 = vmatpush1.xpose.msra.mxu0 0.0
    %1086 = vmatprep.mubr.f32.mxu0 0.0
    %1087 = vmatmul.mubr.f32.gmra.mrb[0].mxu0 %v1018
    %v1088 = vpop.f32.mrb[0].mxu0
    %v1089 = vadd.f32 0.0, %v1088
    %v1090 = vpop.f32.mrb[0].mxu0
    %1091 = vdwg.mxu0
    %1092 = vrot.lane.b32.xlu0 %v699, 64
    %v1093 = vpop.permute.xlu0 %1092
    %v1094 = vsel %vm556, %v687, 0
    %v1096 = vsel %vm556, %v1093, 0
    %1098 = vmatprep.subr.mxu0 0.0
    %1099 = vmatpush1.xpose.msra.mxu0 %v1096
    %1100 = vmatprep.subr.mxu0 0.0
    %1101 = vmatpush1.xpose.msra.mxu0 0.0
    %1102 = vmatprep.subr.mxu0 0.0
    %1103 = vmatpush1.xpose.msra.mxu0 0.0
    %1104 = vmatprep.subr.mxu0 0.0
    %1105 = vmatpush1.xpose.msra.mxu0 0.0
    %1106 = vmatprep.subr.mxu0 0.0
    %1107 = vmatpush1.xpose.msra.mxu0 0.0
    %1108 = vmatprep.subr.mxu0 0.0
    %1109 = vmatpush1.xpose.msra.mxu0 0.0
    %1110 = vmatprep.subr.mxu0 0.0
    %1111 = vmatpush1.xpose.msra.mxu0 0.0
    %1112 = vmatprep.subr.mxu0 0.0
    %1113 = vmatpush1.xpose.msra.mxu0 0.0
    %1114 = vmatprep.subr.mxu0 0.0
    %1115 = vmatpush1.xpose.msra.mxu0 0.0
    %1116 = vmatprep.subr.mxu0 0.0
    %1117 = vmatpush1.xpose.msra.mxu0 0.0
    %1118 = vmatprep.subr.mxu0 0.0
    %1119 = vmatpush1.xpose.msra.mxu0 0.0
    %1120 = vmatprep.subr.mxu0 0.0
    %1121 = vmatpush1.xpose.msra.mxu0 0.0
    %1122 = vmatprep.subr.mxu0 0.0
    %1123 = vmatpush1.xpose.msra.mxu0 0.0
    %1124 = vmatprep.subr.mxu0 0.0
    %1125 = vmatpush1.xpose.msra.mxu0 0.0
    %1126 = vmatprep.subr.mxu0 0.0
    %1127 = vmatpush1.xpose.msra.mxu0 0.0
    %1128 = vmatprep.subr.mxu0 0.0
    %1129 = vmatpush1.xpose.msra.mxu0 0.0
    %1130 = vmatprep.subr.mxu0 0.0
    %1131 = vmatpush1.xpose.msra.mxu0 0.0
    %1132 = vmatprep.subr.mxu0 0.0
    %1133 = vmatpush1.xpose.msra.mxu0 0.0
    %1134 = vmatprep.subr.mxu0 0.0
    %1135 = vmatpush1.xpose.msra.mxu0 0.0
    %1136 = vmatprep.subr.mxu0 0.0
    %1137 = vmatpush1.xpose.msra.mxu0 0.0
    %1138 = vmatprep.subr.mxu0 0.0
    %1139 = vmatpush1.xpose.msra.mxu0 0.0
    %1140 = vmatprep.subr.mxu0 0.0
    %1141 = vmatpush1.xpose.msra.mxu0 0.0
    %1142 = vmatprep.subr.mxu0 0.0
    %1143 = vmatpush1.xpose.msra.mxu0 0.0
    %1144 = vmatprep.subr.mxu0 0.0
    %1145 = vmatpush1.xpose.msra.mxu0 0.0
    %1146 = vmatprep.subr.mxu0 0.0
    %1147 = vmatpush1.xpose.msra.mxu0 0.0
    %1148 = vmatprep.subr.mxu0 0.0
    %1149 = vmatpush1.xpose.msra.mxu0 0.0
    %1150 = vmatprep.subr.mxu0 0.0
    %1151 = vmatpush1.xpose.msra.mxu0 0.0
    %1152 = vmatprep.subr.mxu0 0.0
    %1153 = vmatpush1.xpose.msra.mxu0 0.0
    %1154 = vmatprep.subr.mxu0 0.0
    %1155 = vmatpush1.xpose.msra.mxu0 0.0
    %1156 = vmatprep.subr.mxu0 0.0
    %1157 = vmatpush1.xpose.msra.mxu0 0.0
    %1158 = vmatprep.subr.mxu0 0.0
    %1159 = vmatpush1.xpose.msra.mxu0 0.0
    %1160 = vmatprep.subr.mxu0 0.0
    %1161 = vmatpush1.xpose.msra.mxu0 0.0
    %1162 = vmatprep.mubr.f32.mxu0 0.0
    %1163 = vmatmul.mubr.f32.gmra.mrb[0].mxu0 %v1094
    %v1164 = vpop.f32.mrb[0].mxu0
    %v1165 = vadd.f32 0.0, %v1164
    %v1166 = vpop.f32.mrb[0].mxu0
    %1167 = vdwg.mxu0
    %1168 = vrot.lane.b32.xlu0 %v701, 64
    %v1169 = vpop.permute.xlu0 %1168
    %v1170 = vsel %vm556, %v689, 0
    %v1172 = vsel %vm556, %v1169, 0
    %1174 = vmatprep.subr.mxu0 0.0
    %1175 = vmatpush1.xpose.msra.mxu0 %v1172
    %1176 = vmatprep.subr.mxu0 0.0
    %1177 = vmatpush1.xpose.msra.mxu0 0.0
    %1178 = vmatprep.subr.mxu0 0.0
    %1179 = vmatpush1.xpose.msra.mxu0 0.0
    %1180 = vmatprep.subr.mxu0 0.0
    %1181 = vmatpush1.xpose.msra.mxu0 0.0
    %1182 = vmatprep.subr.mxu0 0.0
    %1183 = vmatpush1.xpose.msra.mxu0 0.0
    %1184 = vmatprep.subr.mxu0 0.0
    %1185 = vmatpush1.xpose.msra.mxu0 0.0
    %1186 = vmatprep.subr.mxu0 0.0
    %1187 = vmatpush1.xpose.msra.mxu0 0.0
    %1188 = vmatprep.subr.mxu0 0.0
    %1189 = vmatpush1.xpose.msra.mxu0 0.0
    %1190 = vmatprep.subr.mxu0 0.0
    %1191 = vmatpush1.xpose.msra.mxu0 0.0
    %1192 = vmatprep.subr.mxu0 0.0
    %1193 = vmatpush1.xpose.msra.mxu0 0.0
    %1194 = vmatprep.subr.mxu0 0.0
    %1195 = vmatpush1.xpose.msra.mxu0 0.0
    %1196 = vmatprep.subr.mxu0 0.0
    %1197 = vmatpush1.xpose.msra.mxu0 0.0
    %1198 = vmatprep.subr.mxu0 0.0
    %1199 = vmatpush1.xpose.msra.mxu0 0.0
    %1200 = vmatprep.subr.mxu0 0.0
    %1201 = vmatpush1.xpose.msra.mxu0 0.0
    %1202 = vmatprep.subr.mxu0 0.0
    %1203 = vmatpush1.xpose.msra.mxu0 0.0
    %1204 = vmatprep.subr.mxu0 0.0
    %1205 = vmatpush1.xpose.msra.mxu0 0.0
    %1206 = vmatprep.subr.mxu0 0.0
    %1207 = vmatpush1.xpose.msra.mxu0 0.0
    %1208 = vmatprep.subr.mxu0 0.0
    %1209 = vmatpush1.xpose.msra.mxu0 0.0
    %1210 = vmatprep.subr.mxu0 0.0
    %1211 = vmatpush1.xpose.msra.mxu0 0.0
    %1212 = vmatprep.subr.mxu0 0.0
    %1213 = vmatpush1.xpose.msra.mxu0 0.0
    %1214 = vmatprep.subr.mxu0 0.0
    %1215 = vmatpush1.xpose.msra.mxu0 0.0
    %1216 = vmatprep.subr.mxu0 0.0
    %1217 = vmatpush1.xpose.msra.mxu0 0.0
    %1218 = vmatprep.subr.mxu0 0.0
    %1219 = vmatpush1.xpose.msra.mxu0 0.0
    %1220 = vmatprep.subr.mxu0 0.0
    %1221 = vmatpush1.xpose.msra.mxu0 0.0
    %1222 = vmatprep.subr.mxu0 0.0
    %1223 = vmatpush1.xpose.msra.mxu0 0.0
    %1224 = vmatprep.subr.mxu0 0.0
    %1225 = vmatpush1.xpose.msra.mxu0 0.0
    %1226 = vmatprep.subr.mxu0 0.0
    %1227 = vmatpush1.xpose.msra.mxu0 0.0
    %1228 = vmatprep.subr.mxu0 0.0
    %1229 = vmatpush1.xpose.msra.mxu0 0.0
    %1230 = vmatprep.subr.mxu0 0.0
    %1231 = vmatpush1.xpose.msra.mxu0 0.0
    %1232 = vmatprep.subr.mxu0 0.0
    %1233 = vmatpush1.xpose.msra.mxu0 0.0
    %1234 = vmatprep.subr.mxu0 0.0
    %1235 = vmatpush1.xpose.msra.mxu0 0.0
    %1236 = vmatprep.subr.mxu0 0.0
    %1237 = vmatpush1.xpose.msra.mxu0 0.0
    %1238 = vmatprep.mubr.f32.mxu0 0.0
    %1239 = vmatmul.mubr.f32.gmra.mrb[0].mxu0 %v1170
    %v1240 = vpop.f32.mrb[0].mxu0
    %v1241 = vadd.f32 0.0, %v1240
    %v1242 = vpop.f32.mrb[0].mxu0
    %1243 = vdwg.mxu0
    %1244 = vrot.lane.b32.xlu0 %v703, 64
    %v1245 = vpop.permute.xlu0 %1244
    %v1246 = vsel %vm556, %v691, 0
    %v1248 = vsel %vm556, %v1245, 0
    %1250 = vmatprep.subr.mxu0 0.0
    %1251 = vmatpush1.xpose.msra.mxu0 %v1248
    %1252 = vmatprep.subr.mxu0 0.0
    %1253 = vmatpush1.xpose.msra.mxu0 0.0
    %1254 = vmatprep.subr.mxu0 0.0
    %1255 = vmatpush1.xpose.msra.mxu0 0.0
    %1256 = vmatprep.subr.mxu0 0.0
    %1257 = vmatpush1.xpose.msra.mxu0 0.0
    %1258 = vmatprep.subr.mxu0 0.0
    %1259 = vmatpush1.xpose.msra.mxu0 0.0
    %1260 = vmatprep.subr.mxu0 0.0
    %1261 = vmatpush1.xpose.msra.mxu0 0.0
    %1262 = vmatprep.subr.mxu0 0.0
    %1263 = vmatpush1.xpose.msra.mxu0 0.0
    %1264 = vmatprep.subr.mxu0 0.0
    %1265 = vmatpush1.xpose.msra.mxu0 0.0
    %1266 = vmatprep.subr.mxu0 0.0
    %1267 = vmatpush1.xpose.msra.mxu0 0.0
    %1268 = vmatprep.subr.mxu0 0.0
    %1269 = vmatpush1.xpose.msra.mxu0 0.0
    %1270 = vmatprep.subr.mxu0 0.0
    %1271 = vmatpush1.xpose.msra.mxu0 0.0
    %1272 = vmatprep.subr.mxu0 0.0
    %1273 = vmatpush1.xpose.msra.mxu0 0.0
    %1274 = vmatprep.subr.mxu0 0.0
    %1275 = vmatpush1.xpose.msra.mxu0 0.0
    %1276 = vmatprep.subr.mxu0 0.0
    %1277 = vmatpush1.xpose.msra.mxu0 0.0
    %1278 = vmatprep.subr.mxu0 0.0
    %1279 = vmatpush1.xpose.msra.mxu0 0.0
    %1280 = vmatprep.subr.mxu0 0.0
    %1281 = vmatpush1.xpose.msra.mxu0 0.0
    %1282 = vmatprep.subr.mxu0 0.0
    %1283 = vmatpush1.xpose.msra.mxu0 0.0
    %1284 = vmatprep.subr.mxu0 0.0
    %1285 = vmatpush1.xpose.msra.mxu0 0.0
    %1286 = vmatprep.subr.mxu0 0.0
    %1287 = vmatpush1.xpose.msra.mxu0 0.0
    %1288 = vmatprep.subr.mxu0 0.0
    %1289 = vmatpush1.xpose.msra.mxu0 0.0
    %1290 = vmatprep.subr.mxu0 0.0
    %1291 = vmatpush1.xpose.msra.mxu0 0.0
    %1292 = vmatprep.subr.mxu0 0.0
    %1293 = vmatpush1.xpose.msra.mxu0 0.0
    %1294 = vmatprep.subr.mxu0 0.0
    %1295 = vmatpush1.xpose.msra.mxu0 0.0
    %1296 = vmatprep.subr.mxu0 0.0
    %1297 = vmatpush1.xpose.msra.mxu0 0.0
    %1298 = vmatprep.subr.mxu0 0.0
    %1299 = vmatpush1.xpose.msra.mxu0 0.0
    %1300 = vmatprep.subr.mxu0 0.0
    %1301 = vmatpush1.xpose.msra.mxu0 0.0
    %1302 = vmatprep.subr.mxu0 0.0
    %1303 = vmatpush1.xpose.msra.mxu0 0.0
    %1304 = vmatprep.subr.mxu0 0.0
    %1305 = vmatpush1.xpose.msra.mxu0 0.0
    %1306 = vmatprep.subr.mxu0 0.0
    %1307 = vmatpush1.xpose.msra.mxu0 0.0
    %1308 = vmatprep.subr.mxu0 0.0
    %1309 = vmatpush1.xpose.msra.mxu0 0.0
    %1310 = vmatprep.subr.mxu0 0.0
    %1311 = vmatpush1.xpose.msra.mxu0 0.0
    %1312 = vmatprep.subr.mxu0 0.0
    %1313 = vmatpush1.xpose.msra.mxu0 0.0
    %1314 = vmatprep.mubr.f32.mxu0 0.0
    %1315 = vmatmul.mubr.f32.gmra.mrb[0].mxu0 %v1246
    %v1316 = vpop.f32.mrb[0].mxu0
    %v1317 = vadd.f32 0.0, %v1316
    %v1318 = vpop.f32.mrb[0].mxu0
    %1319 = vdwg.mxu0
    %vm1320 = vcmask 64512
    %v1321 = vsel %vm1320, %v782, -inf
    %1322 = vmax.xlane.f32.xlu0 %v1321
    %v1323 = vpop.xlane.xlu0 %1322
    %v1324 = vsel %vm1320, %v859, -inf
    %1325 = vmax.xlane.f32.xlu0 %v1324
    %v1326 = vpop.xlane.xlu0 %1325
    %v1327 = vsel %vm1320, %v936, -inf
    %1328 = vmax.xlane.f32.xlu0 %v1327
    %v1329 = vpop.xlane.xlu0 %1328
    %v1330 = vsel %vm1320, %v1013, -inf
    %1331 = vmax.xlane.f32.xlu0 %v1330
    %v1332 = vpop.xlane.xlu0 %1331
    %v1333 = vsel %vm1320, %v1089, -inf
    %1334 = vmax.xlane.f32.xlu0 %v1333
    %v1335 = vpop.xlane.xlu0 %1334
    %v1336 = vsel %vm1320, %v1165, -inf
    %1337 = vmax.xlane.f32.xlu0 %v1336
    %v1338 = vpop.xlane.xlu0 %1337
    %v1339 = vsel %vm1320, %v1241, -inf
    %1340 = vmax.xlane.f32.xlu0 %v1339
    %v1341 = vpop.xlane.xlu0 %1340
    %v1342 = vsel %vm1320, %v1317, -inf
    %1343 = vmax.xlane.f32.xlu0 %v1342
    %v1344 = vpop.xlane.xlu0 %1343
    %v1345 = vsub.f32 %v782, %v1323
    %v1346 = vsub.f32 %v859, %v1326
    %v1347 = vsub.f32 %v936, %v1329
    %v1348 = vsub.f32 %v1013, %v1332
    %v1349 = vsub.f32 %v1089, %v1335
    %v1350 = vsub.f32 %v1165, %v1338
    %v1351 = vsub.f32 %v1241, %v1341
    %v1352 = vsub.f32 %v1317, %v1344
    %v1353 = vmul.f32 %v1345, 1.442695
    %v1354 = vpow.pop %v1353
    %v1355 = vmul.f32 %v1346, 1.442695
    %v1356 = vpow.pop %v1355
    %v1357 = vmul.f32 %v1347, 1.442695
    %v1358 = vpow.pop %v1357
    %v1359 = vmul.f32 %v1348, 1.442695
    %v1360 = vpow.pop %v1359
    %v1361 = vmul.f32 %v1349, 1.442695
    %v1362 = vpow.pop %v1361
    %v1363 = vmul.f32 %v1350, 1.442695
    %v1364 = vpow.pop %v1363
    %v1365 = vmul.f32 %v1351, 1.442695
    %v1366 = vpow.pop %v1365
    %v1367 = vmul.f32 %v1352, 1.442695
    %v1368 = vpow.pop %v1367
    %v1369 = vsel %vm1320, %v1354, 0.0
    %1370 = vadd.xlane.f32.xlu0 %v1369
    %v1371 = vpop.xlane.xlu0 %1370
    %v1372 = vsel %vm1320, %v1356, 0.0
    %1373 = vadd.xlane.f32.xlu0 %v1372
    %v1374 = vpop.xlane.xlu0 %1373
    %v1375 = vsel %vm1320, %v1358, 0.0
    %1376 = vadd.xlane.f32.xlu0 %v1375
    %v1377 = vpop.xlane.xlu0 %1376
    %v1378 = vsel %vm1320, %v1360, 0.0
    %1379 = vadd.xlane.f32.xlu0 %v1378
    %v1380 = vpop.xlane.xlu0 %1379
    %v1381 = vsel %vm1320, %v1362, 0.0
    %1382 = vadd.xlane.f32.xlu0 %v1381
    %v1383 = vpop.xlane.xlu0 %1382
    %v1384 = vsel %vm1320, %v1364, 0.0
    %1385 = vadd.xlane.f32.xlu0 %v1384
    %v1386 = vpop.xlane.xlu0 %1385
    %v1387 = vsel %vm1320, %v1366, 0.0
    %1388 = vadd.xlane.f32.xlu0 %v1387
    %v1389 = vpop.xlane.xlu0 %1388
    %v1390 = vsel %vm1320, %v1368, 0.0
    %1391 = vadd.xlane.f32.xlu0 %v1390
    %v1392 = vpop.xlane.xlu0 %1391
    %v1393 = vrcp.pop %v1371
    %v1394 = vmul.f32 %v1354, %v1393
    %v1395 = vrcp.pop %v1374
    %v1396 = vmul.f32 %v1356, %v1395
    %v1397 = vrcp.pop %v1377
    %v1398 = vmul.f32 %v1358, %v1397
    %v1399 = vrcp.pop %v1380
    %v1400 = vmul.f32 %v1360, %v1399
    %v1401 = vrcp.pop %v1383
    %v1402 = vmul.f32 %v1362, %v1401
    %v1403 = vrcp.pop %v1386
    %v1404 = vmul.f32 %v1364, %v1403
    %v1405 = vrcp.pop %v1389
    %v1406 = vmul.f32 %v1366, %v1405
    %v1407 = vrcp.pop %v1392
    %v1408 = vmul.f32 %v1368, %v1407
    %v1410 = vsel %vm1320, %v1394, 0
    %1412 = vmatprep.subr.mxu0 0.0
    %1413 = vmatpush1.msra.mxu0 %v669
    %1414 = vmatprep.subr.mxu0 0.0
    %1415 = vmatpush1.msra.mxu0 0.0
    %1416 = vmatprep.subr.mxu0 0.0
    %1417 = vmatpush1.msra.mxu0 0.0
    %1418 = vmatprep.subr.mxu0 0.0
    %1419 = vmatpush1.msra.mxu0 0.0
    %1420 = vmatprep.subr.mxu0 0.0
    %1421 = vmatpush1.msra.mxu0 0.0
    %1422 = vmatprep.subr.mxu0 0.0
    %1423 = vmatpush1.msra.mxu0 0.0
    %1424 = vmatprep.subr.mxu0 0.0
    %1425 = vmatpush1.msra.mxu0 0.0
    %1426 = vmatprep.subr.mxu0 0.0
    %1427 = vmatpush1.msra.mxu0 0.0
    %1428 = vmatprep.subr.mxu0 0.0
    %1429 = vmatpush1.msra.mxu0 0.0
    %1430 = vmatprep.subr.mxu0 0.0
    %1431 = vmatpush1.msra.mxu0 0.0
    %1432 = vmatprep.subr.mxu0 0.0
    %1433 = vmatpush1.msra.mxu0 0.0
    %1434 = vmatprep.subr.mxu0 0.0
    %1435 = vmatpush1.msra.mxu0 0.0
    %1436 = vmatprep.subr.mxu0 0.0
    %1437 = vmatpush1.msra.mxu0 0.0
    %1438 = vmatprep.subr.mxu0 0.0
    %1439 = vmatpush1.msra.mxu0 0.0
    %1440 = vmatprep.subr.mxu0 0.0
    %1441 = vmatpush1.msra.mxu0 0.0
    %1442 = vmatprep.subr.mxu0 0.0
    %1443 = vmatpush1.msra.mxu0 0.0
    %1444 = vmatprep.subr.mxu0 0.0
    %1445 = vmatpush1.msra.mxu0 0.0
    %1446 = vmatprep.subr.mxu0 0.0
    %1447 = vmatpush1.msra.mxu0 0.0
    %1448 = vmatprep.subr.mxu0 0.0
    %1449 = vmatpush1.msra.mxu0 0.0
    %1450 = vmatprep.subr.mxu0 0.0
    %1451 = vmatpush1.msra.mxu0 0.0
    %1452 = vmatprep.subr.mxu0 0.0
    %1453 = vmatpush1.msra.mxu0 0.0
    %1454 = vmatprep.subr.mxu0 0.0
    %1455 = vmatpush1.msra.mxu0 0.0
    %1456 = vmatprep.subr.mxu0 0.0
    %1457 = vmatpush1.msra.mxu0 0.0
    %1458 = vmatprep.subr.mxu0 0.0
    %1459 = vmatpush1.msra.mxu0 0.0
    %1460 = vmatprep.subr.mxu0 0.0
    %1461 = vmatpush1.msra.mxu0 0.0
    %1462 = vmatprep.subr.mxu0 0.0
    %1463 = vmatpush1.msra.mxu0 0.0
    %1464 = vmatprep.subr.mxu0 0.0
    %1465 = vmatpush1.msra.mxu0 0.0
    %1466 = vmatprep.subr.mxu0 0.0
    %1467 = vmatpush1.msra.mxu0 0.0
    %1468 = vmatprep.subr.mxu0 0.0
    %1469 = vmatpush1.msra.mxu0 0.0
    %1470 = vmatprep.subr.mxu0 0.0
    %1471 = vmatpush1.msra.mxu0 0.0
    %1472 = vmatprep.subr.mxu0 0.0
    %1473 = vmatpush1.msra.mxu0 0.0
    %1474 = vmatprep.subr.mxu0 0.0
    %1475 = vmatpush1.msra.mxu0 0.0
    %1476 = vmatprep.mubr.f32.mxu0 0.0
    %1477 = vmatmul.mubr.f32.gmra.mrb[0].mxu0 %v1410
    %v1478 = vpop.f32.mrb[0].mxu0
    %v1479 = vadd.f32 0.0, %v1478
    %v1480 = vpop.f32.mrb[0].mxu0
    %1481 = vdwg.mxu0
    %v1483 = vsel %vm1320, %v1396, 0
    %1485 = vmatprep.subr.mxu0 0.0
    %1486 = vmatpush1.msra.mxu0 %v672
    %1487 = vmatprep.subr.mxu0 0.0
    %1488 = vmatpush1.msra.mxu0 0.0
    %1489 = vmatprep.subr.mxu0 0.0
    %1490 = vmatpush1.msra.mxu0 0.0
    %1491 = vmatprep.subr.mxu0 0.0
    %1492 = vmatpush1.msra.mxu0 0.0
    %1493 = vmatprep.subr.mxu0 0.0
    %1494 = vmatpush1.msra.mxu0 0.0
    %1495 = vmatprep.subr.mxu0 0.0
    %1496 = vmatpush1.msra.mxu0 0.0
    %1497 = vmatprep.subr.mxu0 0.0
    %1498 = vmatpush1.msra.mxu0 0.0
    %1499 = vmatprep.subr.mxu0 0.0
    %1500 = vmatpush1.msra.mxu0 0.0
    %1501 = vmatprep.subr.mxu0 0.0
    %1502 = vmatpush1.msra.mxu0 0.0
    %1503 = vmatprep.subr.mxu0 0.0
    %1504 = vmatpush1.msra.mxu0 0.0
    %1505 = vmatprep.subr.mxu0 0.0
    %1506 = vmatpush1.msra.mxu0 0.0
    %1507 = vmatprep.subr.mxu0 0.0
    %1508 = vmatpush1.msra.mxu0 0.0
    %1509 = vmatprep.subr.mxu0 0.0
    %1510 = vmatpush1.msra.mxu0 0.0
    %1511 = vmatprep.subr.mxu0 0.0
    %1512 = vmatpush1.msra.mxu0 0.0
    %1513 = vmatprep.subr.mxu0 0.0
    %1514 = vmatpush1.msra.mxu0 0.0
    %1515 = vmatprep.subr.mxu0 0.0
    %1516 = vmatpush1.msra.mxu0 0.0
    %1517 = vmatprep.subr.mxu0 0.0
    %1518 = vmatpush1.msra.mxu0 0.0
    %1519 = vmatprep.subr.mxu0 0.0
    %1520 = vmatpush1.msra.mxu0 0.0
    %1521 = vmatprep.subr.mxu0 0.0
    %1522 = vmatpush1.msra.mxu0 0.0
    %1523 = vmatprep.subr.mxu0 0.0
    %1524 = vmatpush1.msra.mxu0 0.0
    %1525 = vmatprep.subr.mxu0 0.0
    %1526 = vmatpush1.msra.mxu0 0.0
    %1527 = vmatprep.subr.mxu0 0.0
    %1528 = vmatpush1.msra.mxu0 0.0
    %1529 = vmatprep.subr.mxu0 0.0
    %1530 = vmatpush1.msra.mxu0 0.0
    %1531 = vmatprep.subr.mxu0 0.0
    %1532 = vmatpush1.msra.mxu0 0.0
    %1533 = vmatprep.subr.mxu0 0.0
    %1534 = vmatpush1.msra.mxu0 0.0
    %1535 = vmatprep.subr.mxu0 0.0
    %1536 = vmatpush1.msra.mxu0 0.0
    %1537 = vmatprep.subr.mxu0 0.0
    %1538 = vmatpush1.msra.mxu0 0.0
    %1539 = vmatprep.subr.mxu0 0.0
    %1540 = vmatpush1.msra.mxu0 0.0
    %1541 = vmatprep.subr.mxu0 0.0
    %1542 = vmatpush1.msra.mxu0 0.0
    %1543 = vmatprep.subr.mxu0 0.0
    %1544 = vmatpush1.msra.mxu0 0.0
    %1545 = vmatprep.subr.mxu0 0.0
    %1546 = vmatpush1.msra.mxu0 0.0
    %1547 = vmatprep.subr.mxu0 0.0
    %1548 = vmatpush1.msra.mxu0 0.0
    %1549 = vmatprep.mubr.f32.mxu0 0.0
    %1550 = vmatmul.mubr.f32.gmra.mrb[0].mxu0 %v1483
    %v1551 = vpop.f32.mrb[0].mxu0
    %v1552 = vadd.f32 0.0, %v1551
    %v1553 = vpop.f32.mrb[0].mxu0
    %1554 = vdwg.mxu0
    %v1556 = vsel %vm1320, %v1398, 0
    %1558 = vmatprep.subr.mxu0 0.0
    %1559 = vmatpush1.msra.mxu0 %v675
    %1560 = vmatprep.subr.mxu0 0.0
    %1561 = vmatpush1.msra.mxu0 0.0
    %1562 = vmatprep.subr.mxu0 0.0
    %1563 = vmatpush1.msra.mxu0 0.0
    %1564 = vmatprep.subr.mxu0 0.0
    %1565 = vmatpush1.msra.mxu0 0.0
    %1566 = vmatprep.subr.mxu0 0.0
    %1567 = vmatpush1.msra.mxu0 0.0
    %1568 = vmatprep.subr.mxu0 0.0
    %1569 = vmatpush1.msra.mxu0 0.0
    %1570 = vmatprep.subr.mxu0 0.0
    %1571 = vmatpush1.msra.mxu0 0.0
    %1572 = vmatprep.subr.mxu0 0.0
    %1573 = vmatpush1.msra.mxu0 0.0
    %1574 = vmatprep.subr.mxu0 0.0
    %1575 = vmatpush1.msra.mxu0 0.0
    %1576 = vmatprep.subr.mxu0 0.0
    %1577 = vmatpush1.msra.mxu0 0.0
    %1578 = vmatprep.subr.mxu0 0.0
    %1579 = vmatpush1.msra.mxu0 0.0
    %1580 = vmatprep.subr.mxu0 0.0
    %1581 = vmatpush1.msra.mxu0 0.0
    %1582 = vmatprep.subr.mxu0 0.0
    %1583 = vmatpush1.msra.mxu0 0.0
    %1584 = vmatprep.subr.mxu0 0.0
    %1585 = vmatpush1.msra.mxu0 0.0
    %1586 = vmatprep.subr.mxu0 0.0
    %1587 = vmatpush1.msra.mxu0 0.0
    %1588 = vmatprep.subr.mxu0 0.0
    %1589 = vmatpush1.msra.mxu0 0.0
    %1590 = vmatprep.subr.mxu0 0.0
    %1591 = vmatpush1.msra.mxu0 0.0
    %1592 = vmatprep.subr.mxu0 0.0
    %1593 = vmatpush1.msra.mxu0 0.0
    %1594 = vmatprep.subr.mxu0 0.0
    %1595 = vmatpush1.msra.mxu0 0.0
    %1596 = vmatprep.subr.mxu0 0.0
    %1597 = vmatpush1.msra.mxu0 0.0
    %1598 = vmatprep.subr.mxu0 0.0
    %1599 = vmatpush1.msra.mxu0 0.0
    %1600 = vmatprep.subr.mxu0 0.0
    %1601 = vmatpush1.msra.mxu0 0.0
    %1602 = vmatprep.subr.mxu0 0.0
    %1603 = vmatpush1.msra.mxu0 0.0
    %1604 = vmatprep.subr.mxu0 0.0
    %1605 = vmatpush1.msra.mxu0 0.0
    %1606 = vmatprep.subr.mxu0 0.0
    %1607 = vmatpush1.msra.mxu0 0.0
    %1608 = vmatprep.subr.mxu0 0.0
    %1609 = vmatpush1.msra.mxu0 0.0
    %1610 = vmatprep.subr.mxu0 0.0
    %1611 = vmatpush1.msra.mxu0 0.0
    %1612 = vmatprep.subr.mxu0 0.0
    %1613 = vmatpush1.msra.mxu0 0.0
    %1614 = vmatprep.subr.mxu0 0.0
    %1615 = vmatpush1.msra.mxu0 0.0
    %1616 = vmatprep.subr.mxu0 0.0
    %1617 = vmatpush1.msra.mxu0 0.0
    %1618 = vmatprep.subr.mxu0 0.0
    %1619 = vmatpush1.msra.mxu0 0.0
    %1620 = vmatprep.subr.mxu0 0.0
    %1621 = vmatpush1.msra.mxu0 0.0
    %1622 = vmatprep.mubr.f32.mxu0 0.0
    %1623 = vmatmul.mubr.f32.gmra.mrb[0].mxu0 %v1556
    %v1624 = vpop.f32.mrb[0].mxu0
    %v1625 = vadd.f32 0.0, %v1624
    %v1626 = vpop.f32.mrb[0].mxu0
    %1627 = vdwg.mxu0
    %v1629 = vsel %vm1320, %v1400, 0
    %1631 = vmatprep.subr.mxu0 0.0
    %1632 = vmatpush1.msra.mxu0 %v678
    %1633 = vmatprep.subr.mxu0 0.0
    %1634 = vmatpush1.msra.mxu0 0.0
    %1635 = vmatprep.subr.mxu0 0.0
    %1636 = vmatpush1.msra.mxu0 0.0
    %1637 = vmatprep.subr.mxu0 0.0
    %1638 = vmatpush1.msra.mxu0 0.0
    %1639 = vmatprep.subr.mxu0 0.0
    %1640 = vmatpush1.msra.mxu0 0.0
    %1641 = vmatprep.subr.mxu0 0.0
    %1642 = vmatpush1.msra.mxu0 0.0
    %1643 = vmatprep.subr.mxu0 0.0
    %1644 = vmatpush1.msra.mxu0 0.0
    %1645 = vmatprep.subr.mxu0 0.0
    %1646 = vmatpush1.msra.mxu0 0.0
    %1647 = vmatprep.subr.mxu0 0.0
    %1648 = vmatpush1.msra.mxu0 0.0
    %1649 = vmatprep.subr.mxu0 0.0
    %1650 = vmatpush1.msra.mxu0 0.0
    %1651 = vmatprep.subr.mxu0 0.0
    %1652 = vmatpush1.msra.mxu0 0.0
    %1653 = vmatprep.subr.mxu0 0.0
    %1654 = vmatpush1.msra.mxu0 0.0
    %1655 = vmatprep.subr.mxu0 0.0
    %1656 = vmatpush1.msra.mxu0 0.0
    %1657 = vmatprep.subr.mxu0 0.0
    %1658 = vmatpush1.msra.mxu0 0.0
    %1659 = vmatprep.subr.mxu0 0.0
    %1660 = vmatpush1.msra.mxu0 0.0
    %1661 = vmatprep.subr.mxu0 0.0
    %1662 = vmatpush1.msra.mxu0 0.0
    %1663 = vmatprep.subr.mxu0 0.0
    %1664 = vmatpush1.msra.mxu0 0.0
    %1665 = vmatprep.subr.mxu0 0.0
    %1666 = vmatpush1.msra.mxu0 0.0
    %1667 = vmatprep.subr.mxu0 0.0
    %1668 = vmatpush1.msra.mxu0 0.0
    %1669 = vmatprep.subr.mxu0 0.0
    %1670 = vmatpush1.msra.mxu0 0.0
    %1671 = vmatprep.subr.mxu0 0.0
    %1672 = vmatpush1.msra.mxu0 0.0
    %1673 = vmatprep.subr.mxu0 0.0
    %1674 = vmatpush1.msra.mxu0 0.0
    %1675 = vmatprep.subr.mxu0 0.0
    %1676 = vmatpush1.msra.mxu0 0.0
    %1677 = vmatprep.subr.mxu0 0.0
    %1678 = vmatpush1.msra.mxu0 0.0
    %1679 = vmatprep.subr.mxu0 0.0
    %1680 = vmatpush1.msra.mxu0 0.0
    %1681 = vmatprep.subr.mxu0 0.0
    %1682 = vmatpush1.msra.mxu0 0.0
    %1683 = vmatprep.subr.mxu0 0.0
    %1684 = vmatpush1.msra.mxu0 0.0
    %1685 = vmatprep.subr.mxu0 0.0
    %1686 = vmatpush1.msra.mxu0 0.0
    %1687 = vmatprep.subr.mxu0 0.0
    %1688 = vmatpush1.msra.mxu0 0.0
    %1689 = vmatprep.subr.mxu0 0.0
    %1690 = vmatpush1.msra.mxu0 0.0
    %1691 = vmatprep.subr.mxu0 0.0
    %1692 = vmatpush1.msra.mxu0 0.0
    %1693 = vmatprep.subr.mxu0 0.0
    %1694 = vmatpush1.msra.mxu0 0.0
    %1695 = vmatprep.mubr.f32.mxu0 0.0
    %1696 = vmatmul.mubr.f32.gmra.mrb[0].mxu0 %v1629
    %v1697 = vpop.f32.mrb[0].mxu0
    %v1698 = vadd.f32 0.0, %v1697
    %v1699 = vpop.f32.mrb[0].mxu0
    %1700 = vdwg.mxu0
    %v1702 = vsel %vm1320, %v1402, 0
    %1704 = vmatprep.subr.mxu0 0.0
    %1705 = vmatpush1.msra.mxu0 %v697
    %1706 = vmatprep.subr.mxu0 0.0
    %1707 = vmatpush1.msra.mxu0 0.0
    %1708 = vmatprep.subr.mxu0 0.0
    %1709 = vmatpush1.msra.mxu0 0.0
    %1710 = vmatprep.subr.mxu0 0.0
    %1711 = vmatpush1.msra.mxu0 0.0
    %1712 = vmatprep.subr.mxu0 0.0
    %1713 = vmatpush1.msra.mxu0 0.0
    %1714 = vmatprep.subr.mxu0 0.0
    %1715 = vmatpush1.msra.mxu0 0.0
    %1716 = vmatprep.subr.mxu0 0.0
    %1717 = vmatpush1.msra.mxu0 0.0
    %1718 = vmatprep.subr.mxu0 0.0
    %1719 = vmatpush1.msra.mxu0 0.0
    %1720 = vmatprep.subr.mxu0 0.0
    %1721 = vmatpush1.msra.mxu0 0.0
    %1722 = vmatprep.subr.mxu0 0.0
    %1723 = vmatpush1.msra.mxu0 0.0
    %1724 = vmatprep.subr.mxu0 0.0
    %1725 = vmatpush1.msra.mxu0 0.0
    %1726 = vmatprep.subr.mxu0 0.0
    %1727 = vmatpush1.msra.mxu0 0.0
    %1728 = vmatprep.subr.mxu0 0.0
    %1729 = vmatpush1.msra.mxu0 0.0
    %1730 = vmatprep.subr.mxu0 0.0
    %1731 = vmatpush1.msra.mxu0 0.0
    %1732 = vmatprep.subr.mxu0 0.0
    %1733 = vmatpush1.msra.mxu0 0.0
    %1734 = vmatprep.subr.mxu0 0.0
    %1735 = vmatpush1.msra.mxu0 0.0
    %1736 = vmatprep.subr.mxu0 0.0
    %1737 = vmatpush1.msra.mxu0 0.0
    %1738 = vmatprep.subr.mxu0 0.0
    %1739 = vmatpush1.msra.mxu0 0.0
    %1740 = vmatprep.subr.mxu0 0.0
    %1741 = vmatpush1.msra.mxu0 0.0
    %1742 = vmatprep.subr.mxu0 0.0
    %1743 = vmatpush1.msra.mxu0 0.0
    %1744 = vmatprep.subr.mxu0 0.0
    %1745 = vmatpush1.msra.mxu0 0.0
    %1746 = vmatprep.subr.mxu0 0.0
    %1747 = vmatpush1.msra.mxu0 0.0
    %1748 = vmatprep.subr.mxu0 0.0
    %1749 = vmatpush1.msra.mxu0 0.0
    %1750 = vmatprep.subr.mxu0 0.0
    %1751 = vmatpush1.msra.mxu0 0.0
    %1752 = vmatprep.subr.mxu0 0.0
    %1753 = vmatpush1.msra.mxu0 0.0
    %1754 = vmatprep.subr.mxu0 0.0
    %1755 = vmatpush1.msra.mxu0 0.0
    %1756 = vmatprep.subr.mxu0 0.0
    %1757 = vmatpush1.msra.mxu0 0.0
    %1758 = vmatprep.subr.mxu0 0.0
    %1759 = vmatpush1.msra.mxu0 0.0
    %1760 = vmatprep.subr.mxu0 0.0
    %1761 = vmatpush1.msra.mxu0 0.0
    %1762 = vmatprep.subr.mxu0 0.0
    %1763 = vmatpush1.msra.mxu0 0.0
    %1764 = vmatprep.subr.mxu0 0.0
    %1765 = vmatpush1.msra.mxu0 0.0
    %1766 = vmatprep.subr.mxu0 0.0
    %1767 = vmatpush1.msra.mxu0 0.0
    %1768 = vmatprep.mubr.f32.mxu0 0.0
    %1769 = vmatmul.mubr.f32.gmra.mrb[0].mxu0 %v1702
    %v1770 = vpop.f32.mrb[0].mxu0
    %v1771 = vadd.f32 0.0, %v1770
    %v1772 = vpop.f32.mrb[0].mxu0
    %1773 = vdwg.mxu0
    %v1775 = vsel %vm1320, %v1404, 0
    %1777 = vmatprep.subr.mxu0 0.0
    %1778 = vmatpush1.msra.mxu0 %v699
    %1779 = vmatprep.subr.mxu0 0.0
    %1780 = vmatpush1.msra.mxu0 0.0
    %1781 = vmatprep.subr.mxu0 0.0
    %1782 = vmatpush1.msra.mxu0 0.0
    %1783 = vmatprep.subr.mxu0 0.0
    %1784 = vmatpush1.msra.mxu0 0.0
    %1785 = vmatprep.subr.mxu0 0.0
    %1786 = vmatpush1.msra.mxu0 0.0
    %1787 = vmatprep.subr.mxu0 0.0
    %1788 = vmatpush1.msra.mxu0 0.0
    %1789 = vmatprep.subr.mxu0 0.0
    %1790 = vmatpush1.msra.mxu0 0.0
    %1791 = vmatprep.subr.mxu0 0.0
    %1792 = vmatpush1.msra.mxu0 0.0
    %1793 = vmatprep.subr.mxu0 0.0
    %1794 = vmatpush1.msra.mxu0 0.0
    %1795 = vmatprep.subr.mxu0 0.0
    %1796 = vmatpush1.msra.mxu0 0.0
    %1797 = vmatprep.subr.mxu0 0.0
    %1798 = vmatpush1.msra.mxu0 0.0
    %1799 = vmatprep.subr.mxu0 0.0
    %1800 = vmatpush1.msra.mxu0 0.0
    %1801 = vmatprep.subr.mxu0 0.0
    %1802 = vmatpush1.msra.mxu0 0.0
    %1803 = vmatprep.subr.mxu0 0.0
    %1804 = vmatpush1.msra.mxu0 0.0
    %1805 = vmatprep.subr.mxu0 0.0
    %1806 = vmatpush1.msra.mxu0 0.0
    %1807 = vmatprep.subr.mxu0 0.0
    %1808 = vmatpush1.msra.mxu0 0.0
    %1809 = vmatprep.subr.mxu0 0.0
    %1810 = vmatpush1.msra.mxu0 0.0
    %1811 = vmatprep.subr.mxu0 0.0
    %1812 = vmatpush1.msra.mxu0 0.0
    %1813 = vmatprep.subr.mxu0 0.0
    %1814 = vmatpush1.msra.mxu0 0.0
    %1815 = vmatprep.subr.mxu0 0.0
    %1816 = vmatpush1.msra.mxu0 0.0
    %1817 = vmatprep.subr.mxu0 0.0
    %1818 = vmatpush1.msra.mxu0 0.0
    %1819 = vmatprep.subr.mxu0 0.0
    %1820 = vmatpush1.msra.mxu0 0.0
    %1821 = vmatprep.subr.mxu0 0.0
    %1822 = vmatpush1.msra.mxu0 0.0
    %1823 = vmatprep.subr.mxu0 0.0
    %1824 = vmatpush1.msra.mxu0 0.0
    %1825 = vmatprep.subr.mxu0 0.0
    %1826 = vmatpush1.msra.mxu0 0.0
    %1827 = vmatprep.subr.mxu0 0.0
    %1828 = vmatpush1.msra.mxu0 0.0
    %1829 = vmatprep.subr.mxu0 0.0
    %1830 = vmatpush1.msra.mxu0 0.0
    %1831 = vmatprep.subr.mxu0 0.0
    %1832 = vmatpush1.msra.mxu0 0.0
    %1833 = vmatprep.subr.mxu0 0.0
    %1834 = vmatpush1.msra.mxu0 0.0
    %1835 = vmatprep.subr.mxu0 0.0
    %1836 = vmatpush1.msra.mxu0 0.0
    %1837 = vmatprep.subr.mxu0 0.0
    %1838 = vmatpush1.msra.mxu0 0.0
    %1839 = vmatprep.subr.mxu0 0.0
    %1840 = vmatpush1.msra.mxu0 0.0
    %1841 = vmatprep.mubr.f32.mxu0 0.0
    %1842 = vmatmul.mubr.f32.gmra.mrb[0].mxu0 %v1775
    %v1843 = vpop.f32.mrb[0].mxu0
    %v1844 = vadd.f32 0.0, %v1843
    %v1845 = vpop.f32.mrb[0].mxu0
    %1846 = vdwg.mxu0
    %v1848 = vsel %vm1320, %v1406, 0
    %1850 = vmatprep.subr.mxu0 0.0
    %1851 = vmatpush1.msra.mxu0 %v701
    %1852 = vmatprep.subr.mxu0 0.0
    %1853 = vmatpush1.msra.mxu0 0.0
    %1854 = vmatprep.subr.mxu0 0.0
    %1855 = vmatpush1.msra.mxu0 0.0
    %1856 = vmatprep.subr.mxu0 0.0
    %1857 = vmatpush1.msra.mxu0 0.0
    %1858 = vmatprep.subr.mxu0 0.0
    %1859 = vmatpush1.msra.mxu0 0.0
    %1860 = vmatprep.subr.mxu0 0.0
    %1861 = vmatpush1.msra.mxu0 0.0
    %1862 = vmatprep.subr.mxu0 0.0
    %1863 = vmatpush1.msra.mxu0 0.0
    %1864 = vmatprep.subr.mxu0 0.0
    %1865 = vmatpush1.msra.mxu0 0.0
    %1866 = vmatprep.subr.mxu0 0.0
    %1867 = vmatpush1.msra.mxu0 0.0
    %1868 = vmatprep.subr.mxu0 0.0
    %1869 = vmatpush1.msra.mxu0 0.0
    %1870 = vmatprep.subr.mxu0 0.0
    %1871 = vmatpush1.msra.mxu0 0.0
    %1872 = vmatprep.subr.mxu0 0.0
    %1873 = vmatpush1.msra.mxu0 0.0
    %1874 = vmatprep.subr.mxu0 0.0
    %1875 = vmatpush1.msra.mxu0 0.0
    %1876 = vmatprep.subr.mxu0 0.0
    %1877 = vmatpush1.msra.mxu0 0.0
    %1878 = vmatprep.subr.mxu0 0.0
    %1879 = vmatpush1.msra.mxu0 0.0
    %1880 = vmatprep.subr.mxu0 0.0
    %1881 = vmatpush1.msra.mxu0 0.0
    %1882 = vmatprep.subr.mxu0 0.0
    %1883 = vmatpush1.msra.mxu0 0.0
    %1884 = vmatprep.subr.mxu0 0.0
    %1885 = vmatpush1.msra.mxu0 0.0
    %1886 = vmatprep.subr.mxu0 0.0
    %1887 = vmatpush1.msra.mxu0 0.0
    %1888 = vmatprep.subr.mxu0 0.0
    %1889 = vmatpush1.msra.mxu0 0.0
    %1890 = vmatprep.subr.mxu0 0.0
    %1891 = vmatpush1.msra.mxu0 0.0
    %1892 = vmatprep.subr.mxu0 0.0
    %1893 = vmatpush1.msra.mxu0 0.0
    %1894 = vmatprep.subr.mxu0 0.0
    %1895 = vmatpush1.msra.mxu0 0.0
    %1896 = vmatprep.subr.mxu0 0.0
    %1897 = vmatpush1.msra.mxu0 0.0
    %1898 = vmatprep.subr.mxu0 0.0
    %1899 = vmatpush1.msra.mxu0 0.0
    %1900 = vmatprep.subr.mxu0 0.0
    %1901 = vmatpush1.msra.mxu0 0.0
    %1902 = vmatprep.subr.mxu0 0.0
    %1903 = vmatpush1.msra.mxu0 0.0
    %1904 = vmatprep.subr.mxu0 0.0
    %1905 = vmatpush1.msra.mxu0 0.0
    %1906 = vmatprep.subr.mxu0 0.0
    %1907 = vmatpush1.msra.mxu0 0.0
    %1908 = vmatprep.subr.mxu0 0.0
    %1909 = vmatpush1.msra.mxu0 0.0
    %1910 = vmatprep.subr.mxu0 0.0
    %1911 = vmatpush1.msra.mxu0 0.0
    %1912 = vmatprep.subr.mxu0 0.0
    %1913 = vmatpush1.msra.mxu0 0.0
    %1914 = vmatprep.mubr.f32.mxu0 0.0
    %1915 = vmatmul.mubr.f32.gmra.mrb[0].mxu0 %v1848
    %v1916 = vpop.f32.mrb[0].mxu0
    %v1917 = vadd.f32 0.0, %v1916
    %v1918 = vpop.f32.mrb[0].mxu0
    %1919 = vdwg.mxu0
    %v1921 = vsel %vm1320, %v1408, 0
    %1923 = vmatprep.subr.mxu0 0.0
    %1924 = vmatpush1.msra.mxu0 %v703
    %1925 = vmatprep.subr.mxu0 0.0
    %1926 = vmatpush1.msra.mxu0 0.0
    %1927 = vmatprep.subr.mxu0 0.0
    %1928 = vmatpush1.msra.mxu0 0.0
    %1929 = vmatprep.subr.mxu0 0.0
    %1930 = vmatpush1.msra.mxu0 0.0
    %1931 = vmatprep.subr.mxu0 0.0
    %1932 = vmatpush1.msra.mxu0 0.0
    %1933 = vmatprep.subr.mxu0 0.0
    %1934 = vmatpush1.msra.mxu0 0.0
    %1935 = vmatprep.subr.mxu0 0.0
    %1936 = vmatpush1.msra.mxu0 0.0
    %1937 = vmatprep.subr.mxu0 0.0
    %1938 = vmatpush1.msra.mxu0 0.0
    %1939 = vmatprep.subr.mxu0 0.0
    %1940 = vmatpush1.msra.mxu0 0.0
    %1941 = vmatprep.subr.mxu0 0.0
    %1942 = vmatpush1.msra.mxu0 0.0
    %1943 = vmatprep.subr.mxu0 0.0
    %1944 = vmatpush1.msra.mxu0 0.0
    %1945 = vmatprep.subr.mxu0 0.0
    %1946 = vmatpush1.msra.mxu0 0.0
    %1947 = vmatprep.subr.mxu0 0.0
    %1948 = vmatpush1.msra.mxu0 0.0
    %1949 = vmatprep.subr.mxu0 0.0
    %1950 = vmatpush1.msra.mxu0 0.0
    %1951 = vmatprep.subr.mxu0 0.0
    %1952 = vmatpush1.msra.mxu0 0.0
    %1953 = vmatprep.subr.mxu0 0.0
    %1954 = vmatpush1.msra.mxu0 0.0
    %1955 = vmatprep.subr.mxu0 0.0
    %1956 = vmatpush1.msra.mxu0 0.0
    %1957 = vmatprep.subr.mxu0 0.0
    %1958 = vmatpush1.msra.mxu0 0.0
    %1959 = vmatprep.subr.mxu0 0.0
    %1960 = vmatpush1.msra.mxu0 0.0
    %1961 = vmatprep.subr.mxu0 0.0
    %1962 = vmatpush1.msra.mxu0 0.0
    %1963 = vmatprep.subr.mxu0 0.0
    %1964 = vmatpush1.msra.mxu0 0.0
    %1965 = vmatprep.subr.mxu0 0.0
    %1966 = vmatpush1.msra.mxu0 0.0
    %1967 = vmatprep.subr.mxu0 0.0
    %1968 = vmatpush1.msra.mxu0 0.0
    %1969 = vmatprep.subr.mxu0 0.0
    %1970 = vmatpush1.msra.mxu0 0.0
    %1971 = vmatprep.subr.mxu0 0.0
    %1972 = vmatpush1.msra.mxu0 0.0
    %1973 = vmatprep.subr.mxu0 0.0
    %1974 = vmatpush1.msra.mxu0 0.0
    %1975 = vmatprep.subr.mxu0 0.0
    %1976 = vmatpush1.msra.mxu0 0.0
    %1977 = vmatprep.subr.mxu0 0.0
    %1978 = vmatpush1.msra.mxu0 0.0
    %1979 = vmatprep.subr.mxu0 0.0
    %1980 = vmatpush1.msra.mxu0 0.0
    %1981 = vmatprep.subr.mxu0 0.0
    %1982 = vmatpush1.msra.mxu0 0.0
    %1983 = vmatprep.subr.mxu0 0.0
    %1984 = vmatpush1.msra.mxu0 0.0
    %1985 = vmatprep.subr.mxu0 0.0
    %1986 = vmatpush1.msra.mxu0 0.0
    %1987 = vmatprep.mubr.f32.mxu0 0.0
    %1988 = vmatmul.mubr.f32.gmra.mrb[0].mxu0 %v1921
    %v1989 = vpop.f32.mrb[0].mxu0
    %v1990 = vadd.f32 0.0, %v1989
    %v1991 = vpop.f32.mrb[0].mxu0
    %1992 = vdwg.mxu0
    %1997 = vrot.lane.b32.xlu0 %v1771, 64
    %v1998 = vpop.permute.xlu0 %1997
    %1999 = vrot.lane.b32.xlu0 %v1844, 64
    %v2000 = vpop.permute.xlu0 %1999
    %2001 = vrot.lane.b32.xlu0 %v1917, 64
    %v2002 = vpop.permute.xlu0 %2001
    %2003 = vrot.lane.b32.xlu0 %v1990, 64
    %v2004 = vpop.permute.xlu0 %2003
    %v2009 = vsel %vm556, %v1479, %v1998
    %v2010 = vsel %vm556, %v1552, %v2000
    %v2011 = vsel %vm556, %v1625, %v2002
    %v2012 = vsel %vm556, %v1698, %v2004
    %v2013 = vld [vmem:[%s9] sm:$0x3f]
    %v2014 = vpack.c.bf16 %v2010, %v2009
    %v2015 = vpack.c.bf16 %v2012, %v2011
    %v2016 = vld [vmem:[#allocation5] sm:$0xf]
    %v2017 = vld [vmem:[#allocation5 + $0x4] sm:$0xf]
    %v2018 = vld [vmem:[#allocation5 + $0x8] sm:$0xf]
    %v2019 = vld [vmem:[#allocation5 + $0xc] sm:$0xf]
    %v2020 = vld [vmem:[#allocation5 + $0x10] sm:$0xf]
    %v2021 = vld [vmem:[#allocation5 + $0x14] sm:$0xf]
    %v2022 = vld [vmem:[#allocation5 + $0x18] sm:$0xf]
    %v2023 = vld [vmem:[#allocation5 + $0x1c] sm:$0xf]
    %v2024 = vld [vmem:[#allocation5 + $0x20] sm:$0xf]
    %v2025 = vld [vmem:[#allocation5 + $0x24] sm:$0xf]
    %v2026 = vld [vmem:[#allocation5 + $0x28] sm:$0xf]
    %v2027 = vld [vmem:[#allocation5 + $0x2c] sm:$0xf]
    %v2028 = vld [vmem:[#allocation5 + $0x30] sm:$0xf]
    %v2029 = vld [vmem:[#allocation5 + $0x34] sm:$0xf]
    %v2030 = vld [vmem:[#allocation5 + $0x38] sm:$0xf]
    %v2031 = vld [vmem:[#allocation5 + $0x3c] sm:$0xf]
    %v2032 = vlaneseq
    %v2033 = vshrl.u32 %v2032, 7
    %v2034 = vsub.s32 0, %v2033
    %v2035 = vrot.slane %v2013, %v2034
    %v2052 = vunpack.c.l.b16 %v2016
    %v2053 = vunpack.c.l.b16 %v2017
    %v2054 = vunpack.c.l.b16 %v2018
    %v2055 = vunpack.c.l.b16 %v2019
    %v2056 = vunpack.c.l.b16 %v2020
    %v2057 = vunpack.c.l.b16 %v2021
    %v2058 = vunpack.c.l.b16 %v2022
    %v2059 = vunpack.c.l.b16 %v2023
    %v2060 = vunpack.c.l.b16 %v2024
    %v2061 = vunpack.c.l.b16 %v2025
    %v2062 = vunpack.c.l.b16 %v2026
    %v2063 = vunpack.c.l.b16 %v2027
    %v2064 = vunpack.c.l.b16 %v2028
    %v2065 = vunpack.c.l.b16 %v2029
    %v2066 = vunpack.c.l.b16 %v2030
    %v2067 = vunpack.c.l.b16 %v2031
    %v2068 = vpack.c.b16 %v2053, %v2052
    %v2069 = vpack.c.b16 %v2055, %v2054
    %v2070 = vpack.c.b16 %v2057, %v2056
    %v2071 = vpack.c.b16 %v2059, %v2058
    %v2072 = vpack.c.b16 %v2061, %v2060
    %v2073 = vpack.c.b16 %v2063, %v2062
    %v2074 = vpack.c.b16 %v2065, %v2064
    %v2075 = vpack.c.b16 %v2067, %v2066
    %2084 = vmatprep.subr.bf16.mxu0 0
    %2085 = vmatpush1.bf16.msra.mxu0 %v2068
    %2086 = vmatprep.subr.bf16.mxu0 0
    %2087 = vmatpush1.bf16.msra.mxu0 %v2069
    %2088 = vmatprep.subr.bf16.mxu0 0
    %2089 = vmatpush1.bf16.msra.mxu0 %v2070
    %2090 = vmatprep.subr.bf16.mxu0 0
    %2091 = vmatpush1.bf16.msra.mxu0 %v2071
    %2092 = vmatprep.subr.bf16.mxu0 0
    %2093 = vmatpush1.bf16.msra.mxu0 %v2072
    %2094 = vmatprep.subr.bf16.mxu0 0
    %2095 = vmatpush1.bf16.msra.mxu0 %v2073
    %2096 = vmatprep.subr.bf16.mxu0 0
    %2097 = vmatpush1.bf16.msra.mxu0 %v2074
    %2098 = vmatprep.subr.bf16.mxu0 0
    %2099 = vmatpush1.bf16.msra.mxu0 %v2075
    %2100 = vmatprep.subr.bf16.mxu0 0
    %2101 = vmatpush1.bf16.msra.mxu0 0
    %2102 = vmatprep.subr.bf16.mxu0 0
    %2103 = vmatpush1.bf16.msra.mxu0 0
    %2104 = vmatprep.subr.bf16.mxu0 0
    %2105 = vmatpush1.bf16.msra.mxu0 0
    %2106 = vmatprep.subr.bf16.mxu0 0
    %2107 = vmatpush1.bf16.msra.mxu0 0
    %2108 = vmatprep.subr.bf16.mxu0 0
    %2109 = vmatpush1.bf16.msra.mxu0 0
    %2110 = vmatprep.subr.bf16.mxu0 0
    %2111 = vmatpush1.bf16.msra.mxu0 0
    %2112 = vmatprep.subr.bf16.mxu0 0
    %2113 = vmatpush1.bf16.msra.mxu0 0
    %2114 = vmatprep.subr.bf16.mxu0 0
    %2115 = vmatpush1.bf16.msra.mxu0 0
    %2116 = vmatprep.mubr.bf16.mxu0 0
    %2117 = vmatmul.mubr.bf16.gmra.mrb[0].mxu0 %v2014
    %v2118 = vpop.f32.mrb[0].mxu0
    %v2119 = vadd.f32 %v2035, %v2118
    %v2120 = vpop.f32.mrb[0].mxu0
    %v2121 = vpop.f32.mrb[0].mxu0
    %v2122 = vadd.f32 %v2035, %v2121
    %v2123 = vpop.f32.mrb[0].mxu0
    %2124 = vmatprep.mubr.bf16.mxu0 0
    %2125 = vmatmul.mubr.bf16.gmra.mrb[0].mxu0 %v2015
    %v2126 = vpop.f32.mrb[0].mxu0
    %v2127 = vadd.f32 %v2035, %v2126
    %v2128 = vpop.f32.mrb[0].mxu0
    %v2129 = vpop.f32.mrb[0].mxu0
    %v2130 = vadd.f32 %v2035, %v2129
    %v2131 = vpop.f32.mrb[0].mxu0
    %2132 = vdwg.mxu0
    %2137 = vrot.lane.b32.xlu0 %v460, 64
    %v2138 = vpop.permute.xlu0 %2137
    %2139 = vrot.lane.b32.xlu0 %v463, 64
    %v2140 = vpop.permute.xlu0 %2139
    %2141 = vrot.lane.b32.xlu0 %v468, 64
    %v2142 = vpop.permute.xlu0 %2141
    %2143 = vrot.lane.b32.xlu0 %v471, 64
    %v2144 = vpop.permute.xlu0 %2143
    %v2149 = vsel %vm556, %v460, %v2138
    %v2150 = vsel %vm556, %v463, %v2140
    %v2151 = vsel %vm556, %v468, %v2142
    %v2152 = vsel %vm556, %v471, %v2144
    %v2153 = vadd.f32 %v2149, %v2119
    %v2154 = vadd.f32 %v2150, %v2122
    %v2155 = vadd.f32 %v2151, %v2127
    %v2156 = vadd.f32 %v2152, %v2130
    %v2157 = vsel %vm556, %v2153, 0.0
    %2158 = vadd.xlane.f32.xlu0 %v2157
    %v2159 = vpop.xlane.xlu0 %2158
    %v2160 = vsel %vm556, %v2154, 0.0
    %2161 = vadd.xlane.f32.xlu0 %v2160
    %v2162 = vpop.xlane.xlu0 %2161
    %v2163 = vsel %vm556, %v2155, 0.0
    %2164 = vadd.xlane.f32.xlu0 %v2163
    %v2165 = vpop.xlane.xlu0 %2164
    %v2166 = vsel %vm556, %v2156, 0.0
    %2167 = vadd.xlane.f32.xlu0 %v2166
    %v2168 = vpop.xlane.xlu0 %2167
    %v2169 = vrcp.pop 64.0
    %v2170 = vmul.f32 %v2159, %v2169
    %v2171 = vmul.f32 %v2162, %v2169
    %v2172 = vmul.f32 %v2165, %v2169
    %v2173 = vmul.f32 %v2168, %v2169
    %v2174 = vsub.f32 %v2153, %v2170
    %v2175 = vsub.f32 %v2154, %v2171
    %v2176 = vsub.f32 %v2155, %v2172
    %v2177 = vsub.f32 %v2156, %v2173
    %v2178 = vmul.f32 %v2174, %v2174
    %v2179 = vmul.f32 %v2175, %v2175
    %v2180 = vmul.f32 %v2176, %v2176
    %v2181 = vmul.f32 %v2177, %v2177
    %v2182 = vsel %vm556, %v2178, 0.0
    %2183 = vadd.xlane.f32.xlu0 %v2182
    %v2184 = vpop.xlane.xlu0 %2183
    %v2185 = vsel %vm556, %v2179, 0.0
    %2186 = vadd.xlane.f32.xlu0 %v2185
    %v2187 = vpop.xlane.xlu0 %2186
    %v2188 = vsel %vm556, %v2180, 0.0
    %2189 = vadd.xlane.f32.xlu0 %v2188
    %v2190 = vpop.xlane.xlu0 %2189
    %v2191 = vsel %vm556, %v2181, 0.0
    %2192 = vadd.xlane.f32.xlu0 %v2191
    %v2193 = vpop.xlane.xlu0 %2192
    %v2194 = vmul.f32 %v2184, %v2169
    %v2195 = vmul.f32 %v2187, %v2169
    %v2196 = vmul.f32 %v2190, %v2169
    %v2197 = vmul.f32 %v2193, %v2169
    %v2198 = vadd.f32 %v2194, 1e-05
    %v2199 = vadd.f32 %v2195, 1e-05
    %v2200 = vadd.f32 %v2196, 1e-05
    %v2201 = vadd.f32 %v2197, 1e-05
    %v2202 = vrsqrt.pop %v2198
    %v2203 = vrsqrt.pop %v2199
    %v2204 = vrsqrt.pop %v2200
    %v2205 = vrsqrt.pop %v2201
    %v2206 = vmul.f32 %v2174, %v2202
    %v2207 = vmul.f32 %v2175, %v2203
    %v2208 = vmul.f32 %v2176, %v2204
    %v2209 = vmul.f32 %v2177, %v2205
    %2214 = vrot.lane.b32.xlu0 %v2153, 64
    %v2215 = vpop.permute.xlu0 %2214
    %2216 = vrot.lane.b32.xlu0 %v2154, 64
    %v2217 = vpop.permute.xlu0 %2216
    %2218 = vrot.lane.b32.xlu0 %v2155, 64
    %v2219 = vpop.permute.xlu0 %2218
    %2220 = vrot.lane.b32.xlu0 %v2156, 64
    %v2221 = vpop.permute.xlu0 %2220
    %v2226 = vsel %vm556, %v2215, 0.0
    %2227 = vadd.xlane.f32.xlu0 %v2226
    %v2228 = vpop.xlane.xlu0 %2227
    %v2229 = vsel %vm556, %v2217, 0.0
    %2230 = vadd.xlane.f32.xlu0 %v2229
    %v2231 = vpop.xlane.xlu0 %2230
    %v2232 = vsel %vm556, %v2219, 0.0
    %2233 = vadd.xlane.f32.xlu0 %v2232
    %v2234 = vpop.xlane.xlu0 %2233
    %v2235 = vsel %vm556, %v2221, 0.0
    %2236 = vadd.xlane.f32.xlu0 %v2235
    %v2237 = vpop.xlane.xlu0 %2236
    %v2238 = vmul.f32 %v2228, %v2169
    %v2239 = vmul.f32 %v2231, %v2169
    %v2240 = vmul.f32 %v2234, %v2169
    %v2241 = vmul.f32 %v2237, %v2169
    %v2242 = vsub.f32 %v2153, %v2238
    %v2243 = vsub.f32 %v2154, %v2239
    %v2244 = vsub.f32 %v2155, %v2240
    %v2245 = vsub.f32 %v2156, %v2241
    %v2246 = vmul.f32 %v2242, %v2242
    %v2247 = vmul.f32 %v2243, %v2243
    %v2248 = vmul.f32 %v2244, %v2244
    %v2249 = vmul.f32 %v2245, %v2245
    %2254 = vrot.lane.b32.xlu0 %v2246, 64
    %v2255 = vpop.permute.xlu0 %2254
    %2256 = vrot.lane.b32.xlu0 %v2247, 64
    %v2257 = vpop.permute.xlu0 %2256
    %2258 = vrot.lane.b32.xlu0 %v2248, 64
    %v2259 = vpop.permute.xlu0 %2258
    %2260 = vrot.lane.b32.xlu0 %v2249, 64
    %v2261 = vpop.permute.xlu0 %2260
    %v2266 = vsel %vm556, %v2255, 0.0
    %2267 = vadd.xlane.f32.xlu0 %v2266
    %v2268 = vpop.xlane.xlu0 %2267
    %v2269 = vsel %vm556, %v2257, 0.0
    %2270 = vadd.xlane.f32.xlu0 %v2269
    %v2271 = vpop.xlane.xlu0 %2270
    %v2272 = vsel %vm556, %v2259, 0.0
    %2273 = vadd.xlane.f32.xlu0 %v2272
    %v2274 = vpop.xlane.xlu0 %2273
    %v2275 = vsel %vm556, %v2261, 0.0
    %2276 = vadd.xlane.f32.xlu0 %v2275
    %v2277 = vpop.xlane.xlu0 %2276
    %v2278 = vmul.f32 %v2268, %v2169
    %v2279 = vmul.f32 %v2271, %v2169
    %v2280 = vmul.f32 %v2274, %v2169
    %v2281 = vmul.f32 %v2277, %v2169
    %v2282 = vadd.f32 %v2278, 1e-05
    %v2283 = vadd.f32 %v2279, 1e-05
    %v2284 = vadd.f32 %v2280, 1e-05
    %v2285 = vadd.f32 %v2281, 1e-05
    %v2286 = vrsqrt.pop %v2282
    %v2287 = vrsqrt.pop %v2283
    %v2288 = vrsqrt.pop %v2284
    %v2289 = vrsqrt.pop %v2285
    %v2290 = vmul.f32 %v2242, %v2286
    %v2291 = vmul.f32 %v2243, %v2287
    %v2292 = vmul.f32 %v2244, %v2288
    %v2293 = vmul.f32 %v2245, %v2289
    %v2294 = vsel %vm556, %v2206, %v2290
    %v2295 = vsel %vm556, %v2207, %v2291
    %v2296 = vsel %vm556, %v2208, %v2292
    %v2297 = vsel %vm556, %v2209, %v2293
    %v2298 = vlaneseq
    %v2299 = vshrl.u32 %v2298, 7
    %v2300 = vsub.s32 1, %v2299
    %v2301 = vrot.slane %v2013, %v2300
    %v2302 = vmul.f32 %v2294, %v2301
    %v2303 = vmul.f32 %v2295, %v2301
    %v2304 = vmul.f32 %v2296, %v2301
    %v2305 = vmul.f32 %v2297, %v2301
    %v2306 = vlaneseq
    %v2307 = vshrl.u32 %v2306, 7
    %v2308 = vsub.s32 2, %v2307
    %v2309 = vrot.slane %v2013, %v2308
    %v2310 = vadd.f32 %v2302, %v2309
    %v2311 = vadd.f32 %v2303, %v2309
    %v2312 = vadd.f32 %v2304, %v2309
    %v2313 = vadd.f32 %v2305, %v2309
    %v2314 = vpack.c.bf16 %v2311, %v2310
    %v2315 = vpack.c.bf16 %v2313, %v2312
    %v2316 = vld [vmem:[%s6] sm:$0xff]
    %v2317 = vld [vmem:[%s6 + $0x8] sm:$0xff]
    %v2318 = vld [vmem:[%s6 + $0x10] sm:$0xff]
    %v2319 = vld [vmem:[%s6 + $0x18] sm:$0xff]
    %v2320 = vld [vmem:[%s6 + $0x20] sm:$0xff]
    %v2321 = vld [vmem:[%s6 + $0x28] sm:$0xff]
    %v2322 = vld [vmem:[%s6 + $0x30] sm:$0xff]
    %v2323 = vld [vmem:[%s6 + $0x38] sm:$0xff]
    %v2324 = vld [vmem:[%s6 + $0x40] sm:$0xff]
    %v2325 = vld [vmem:[%s6 + $0x48] sm:$0xff]
    %v2326 = vld [vmem:[%s6 + $0x50] sm:$0xff]
    %v2327 = vld [vmem:[%s6 + $0x58] sm:$0xff]
    %v2328 = vld [vmem:[%s6 + $0x60] sm:$0xff]
    %v2329 = vld [vmem:[%s6 + $0x68] sm:$0xff]
    %v2330 = vld [vmem:[%s6 + $0x70] sm:$0xff]
    %v2331 = vld [vmem:[%s6 + $0x78] sm:$0xff]
    %v2332 = vld [vmem:[%s8] sm:$0x3]
    %v2334 = vlaneseq
    %v2335 = vshrl.u32 %v2334, 7
    %v2336 = vsub.s32 0, %v2335
    %v2337 = vrot.slane %v2332, %v2336
    %v2338 = vlaneseq
    %v2339 = vshrl.u32 %v2338, 7
    %v2340 = vsub.s32 1, %v2339
    %v2341 = vrot.slane %v2332, %v2340
    %v2360 = vunpack.c.l.b16 %v2316
    %v2361 = vunpack.c.h.b16 %v2316
    %v2362 = vunpack.c.l.b16 %v2317
    %v2363 = vunpack.c.h.b16 %v2317
    %v2364 = vunpack.c.l.b16 %v2318
    %v2365 = vunpack.c.h.b16 %v2318
    %v2366 = vunpack.c.l.b16 %v2319
    %v2367 = vunpack.c.h.b16 %v2319
    %v2368 = vunpack.c.l.b16 %v2320
    %v2369 = vunpack.c.h.b16 %v2320
    %v2370 = vunpack.c.l.b16 %v2321
    %v2371 = vunpack.c.h.b16 %v2321
    %v2372 = vunpack.c.l.b16 %v2322
    %v2373 = vunpack.c.h.b16 %v2322
    %v2374 = vunpack.c.l.b16 %v2323
    %v2375 = vunpack.c.h.b16 %v2323
    %v2376 = vunpack.c.l.b16 %v2324
    %v2377 = vunpack.c.h.b16 %v2324
    %v2378 = vunpack.c.l.b16 %v2325
    %v2379 = vunpack.c.h.b16 %v2325
    %v2380 = vunpack.c.l.b16 %v2326
    %v2381 = vunpack.c.h.b16 %v2326
    %v2382 = vunpack.c.l.b16 %v2327
    %v2383 = vunpack.c.h.b16 %v2327
    %v2384 = vunpack.c.l.b16 %v2328
    %v2385 = vunpack.c.h.b16 %v2328
    %v2386 = vunpack.c.l.b16 %v2329
    %v2387 = vunpack.c.h.b16 %v2329
    %v2388 = vunpack.c.l.b16 %v2330
    %v2389 = vunpack.c.h.b16 %v2330
    %v2390 = vunpack.c.l.b16 %v2331
    %v2391 = vunpack.c.h.b16 %v2331
    %v2392 = vpack.c.b16 %v2362, %v2360
    %v2393 = vpack.c.b16 %v2363, %v2361
    %v2394 = vpack.c.b16 %v2366, %v2364
    %v2395 = vpack.c.b16 %v2367, %v2365
    %v2396 = vpack.c.b16 %v2370, %v2368
    %v2397 = vpack.c.b16 %v2371, %v2369
    %v2398 = vpack.c.b16 %v2374, %v2372
    %v2399 = vpack.c.b16 %v2375, %v2373
    %v2400 = vpack.c.b16 %v2378, %v2376
    %v2401 = vpack.c.b16 %v2379, %v2377
    %v2402 = vpack.c.b16 %v2382, %v2380
    %v2403 = vpack.c.b16 %v2383, %v2381
    %v2404 = vpack.c.b16 %v2386, %v2384
    %v2405 = vpack.c.b16 %v2387, %v2385
    %v2406 = vpack.c.b16 %v2390, %v2388
    %v2407 = vpack.c.b16 %v2391, %v2389
    %2424 = vmatprep.subr.bf16.mxu0 %v2393
    %2425 = vmatpush1.bf16.msra.mxu0 %v2392
    %2426 = vmatprep.subr.bf16.mxu0 %v2395
    %2427 = vmatpush1.bf16.msra.mxu0 %v2394
    %2428 = vmatprep.subr.bf16.mxu0 %v2397
    %2429 = vmatpush1.bf16.msra.mxu0 %v2396
    %2430 = vmatprep.subr.bf16.mxu0 %v2399
    %2431 = vmatpush1.bf16.msra.mxu0 %v2398
    %2432 = vmatprep.subr.bf16.mxu0 %v2401
    %2433 = vmatpush1.bf16.msra.mxu0 %v2400
    %2434 = vmatprep.subr.bf16.mxu0 %v2403
    %2435 = vmatpush1.bf16.msra.mxu0 %v2402
    %2436 = vmatprep.subr.bf16.mxu0 %v2405
    %2437 = vmatpush1.bf16.msra.mxu0 %v2404
    %2438 = vmatprep.subr.bf16.mxu0 %v2407
    %2439 = vmatpush1.bf16.msra.mxu0 %v2406
    %2440 = vmatprep.subr.bf16.mxu0 0
    %2441 = vmatpush1.bf16.msra.mxu0 0
    %2442 = vmatprep.subr.bf16.mxu0 0
    %2443 = vmatpush1.bf16.msra.mxu0 0
    %2444 = vmatprep.subr.bf16.mxu0 0
    %2445 = vmatpush1.bf16.msra.mxu0 0
    %2446 = vmatprep.subr.bf16.mxu0 0
    %2447 = vmatpush1.bf16.msra.mxu0 0
    %2448 = vmatprep.subr.bf16.mxu0 0
    %2449 = vmatpush1.bf16.msra.mxu0 0
    %2450 = vmatprep.subr.bf16.mxu0 0
    %2451 = vmatpush1.bf16.msra.mxu0 0
    %2452 = vmatprep.subr.bf16.mxu0 0
    %2453 = vmatpush1.bf16.msra.mxu0 0
    %2454 = vmatprep.subr.bf16.mxu0 0
    %2455 = vmatpush1.bf16.msra.mxu0 0
    %2456 = vmatprep.mubr.bf16.mxu0 0
    %2457 = vmatmul.mubr.bf16.gmra.mrb[0].mxu0 %v2314
    %v2458 = vpop.f32.mrb[0].mxu0
    %v2459 = vadd.f32 %v2337, %v2458
    %v2460 = vpop.f32.mrb[0].mxu0
    %v2461 = vadd.f32 %v2341, %v2460
    %v2462 = vpop.f32.mrb[0].mxu0
    %v2463 = vadd.f32 %v2337, %v2462
    %v2464 = vpop.f32.mrb[0].mxu0
    %v2465 = vadd.f32 %v2341, %v2464
    %2466 = vmatprep.mubr.bf16.mxu0 0
    %2467 = vmatmul.mubr.bf16.gmra.mrb[0].mxu0 %v2315
    %v2468 = vpop.f32.mrb[0].mxu0
    %v2469 = vadd.f32 %v2337, %v2468
    %v2470 = vpop.f32.mrb[0].mxu0
    %v2471 = vadd.f32 %v2341, %v2470
    %v2472 = vpop.f32.mrb[0].mxu0
    %v2473 = vadd.f32 %v2337, %v2472
    %v2474 = vpop.f32.mrb[0].mxu0
    %v2475 = vadd.f32 %v2341, %v2474
    %2476 = vdwg.mxu0
    %v2477 = vmax.f32 %v2459, 0.0
    %v2478 = vmax.f32 %v2461, 0.0
    %v2479 = vmax.f32 %v2463, 0.0
    %v2480 = vmax.f32 %v2465, 0.0
    %v2481 = vmax.f32 %v2469, 0.0
    %v2482 = vmax.f32 %v2471, 0.0
    %v2483 = vmax.f32 %v2473, 0.0
    %v2484 = vmax.f32 %v2475, 0.0
    %v2485 = vpack.c.bf16 %v2479, %v2477
    %v2486 = vpack.c.bf16 %v2480, %v2478
    %v2487 = vpack.c.bf16 %v2483, %v2481
    %v2488 = vpack.c.bf16 %v2484, %v2482
    %v2489 = vld [vmem:[%s7] sm:$0xf]
    %v2490 = vld [vmem:[%s7 + $0x4] sm:$0xf]
    %v2491 = vld [vmem:[%s7 + $0x8] sm:$0xf]
    %v2492 = vld [vmem:[%s7 + $0xc] sm:$0xf]
    %v2493 = vld [vmem:[%s7 + $0x10] sm:$0xf]
    %v2494 = vld [vmem:[%s7 + $0x14] sm:$0xf]
    %v2495 = vld [vmem:[%s7 + $0x18] sm:$0xf]
    %v2496 = vld [vmem:[%s7 + $0x1c] sm:$0xf]
    %v2497 = vld [vmem:[%s7 + $0x20] sm:$0xf]
    %v2498 = vld [vmem:[%s7 + $0x24] sm:$0xf]
    %v2499 = vld [vmem:[%s7 + $0x28] sm:$0xf]
    %v2500 = vld [vmem:[%s7 + $0x2c] sm:$0xf]
    %v2501 = vld [vmem:[%s7 + $0x30] sm:$0xf]
    %v2502 = vld [vmem:[%s7 + $0x34] sm:$0xf]
    %v2503 = vld [vmem:[%s7 + $0x38] sm:$0xf]
    %v2504 = vld [vmem:[%s7 + $0x3c] sm:$0xf]
    %v2505 = vld [vmem:[%s7 + $0x40] sm:$0xf]
    %v2506 = vld [vmem:[%s7 + $0x44] sm:$0xf]
    %v2507 = vld [vmem:[%s7 + $0x48] sm:$0xf]
    %v2508 = vld [vmem:[%s7 + $0x4c] sm:$0xf]
    %v2509 = vld [vmem:[%s7 + $0x50] sm:$0xf]
    %v2510 = vld [vmem:[%s7 + $0x54] sm:$0xf]
    %v2511 = vld [vmem:[%s7 + $0x58] sm:$0xf]
    %v2512 = vld [vmem:[%s7 + $0x5c] sm:$0xf]
    %v2513 = vld [vmem:[%s7 + $0x60] sm:$0xf]
    %v2514 = vld [vmem:[%s7 + $0x64] sm:$0xf]
    %v2515 = vld [vmem:[%s7 + $0x68] sm:$0xf]
    %v2516 = vld [vmem:[%s7 + $0x6c] sm:$0xf]
    %v2517 = vld [vmem:[%s7 + $0x70] sm:$0xf]
    %v2518 = vld [vmem:[%s7 + $0x74] sm:$0xf]
    %v2519 = vld [vmem:[%s7 + $0x78] sm:$0xf]
    %v2520 = vld [vmem:[%s7 + $0x7c] sm:$0xf]
    %v2521 = vlaneseq
    %v2522 = vshrl.u32 %v2521, 7
    %v2523 = vsub.s32 3, %v2522
    %v2524 = vrot.slane %v2013, %v2523
    %v2557 = vunpack.c.l.b16 %v2489
    %v2558 = vunpack.c.l.b16 %v2490
    %v2559 = vunpack.c.l.b16 %v2491
    %v2560 = vunpack.c.l.b16 %v2492
    %v2561 = vunpack.c.l.b16 %v2493
    %v2562 = vunpack.c.l.b16 %v2494
    %v2563 = vunpack.c.l.b16 %v2495
    %v2564 = vunpack.c.l.b16 %v2496
    %v2565 = vunpack.c.l.b16 %v2497
    %v2566 = vunpack.c.l.b16 %v2498
    %v2567 = vunpack.c.l.b16 %v2499
    %v2568 = vunpack.c.l.b16 %v2500
    %v2569 = vunpack.c.l.b16 %v2501
    %v2570 = vunpack.c.l.b16 %v2502
    %v2571 = vunpack.c.l.b16 %v2503
    %v2572 = vunpack.c.l.b16 %v2504
    %v2573 = vunpack.c.l.b16 %v2505
    %v2574 = vunpack.c.l.b16 %v2506
    %v2575 = vunpack.c.l.b16 %v2507
    %v2576 = vunpack.c.l.b16 %v2508
    %v2577 = vunpack.c.l.b16 %v2509
    %v2578 = vunpack.c.l.b16 %v2510
    %v2579 = vunpack.c.l.b16 %v2511
    %v2580 = vunpack.c.l.b16 %v2512
    %v2581 = vunpack.c.l.b16 %v2513
    %v2582 = vunpack.c.l.b16 %v2514
    %v2583 = vunpack.c.l.b16 %v2515
    %v2584 = vunpack.c.l.b16 %v2516
    %v2585 = vunpack.c.l.b16 %v2517
    %v2586 = vunpack.c.l.b16 %v2518
    %v2587 = vunpack.c.l.b16 %v2519
    %v2588 = vunpack.c.l.b16 %v2520
    %v2589 = vpack.c.b16 %v2558, %v2557
    %v2590 = vpack.c.b16 %v2560, %v2559
    %v2591 = vpack.c.b16 %v2562, %v2561
    %v2592 = vpack.c.b16 %v2564, %v2563
    %v2593 = vpack.c.b16 %v2566, %v2565
    %v2594 = vpack.c.b16 %v2568, %v2567
    %v2595 = vpack.c.b16 %v2570, %v2569
    %v2596 = vpack.c.b16 %v2572, %v2571
    %v2597 = vpack.c.b16 %v2574, %v2573
    %v2598 = vpack.c.b16 %v2576, %v2575
    %v2599 = vpack.c.b16 %v2578, %v2577
    %v2600 = vpack.c.b16 %v2580, %v2579
    %v2601 = vpack.c.b16 %v2582, %v2581
    %v2602 = vpack.c.b16 %v2584, %v2583
    %v2603 = vpack.c.b16 %v2586, %v2585
    %v2604 = vpack.c.b16 %v2588, %v2587
    %2621 = vmatprep.subr.bf16.mxu0 0
    %2622 = vmatpush1.bf16.msra.mxu0 %v2589
    %2623 = vmatprep.subr.bf16.mxu0 0
    %2624 = vmatpush1.bf16.msra.mxu0 %v2590
    %2625 = vmatprep.subr.bf16.mxu0 0
    %2626 = vmatpush1.bf16.msra.mxu0 %v2591
    %2627 = vmatprep.subr.bf16.mxu0 0
    %2628 = vmatpush1.bf16.msra.mxu0 %v2592
    %2629 = vmatprep.subr.bf16.mxu0 0
    %2630 = vmatpush1.bf16.msra.mxu0 %v2593
    %2631 = vmatprep.subr.bf16.mxu0 0
    %2632 = vmatpush1.bf16.msra.mxu0 %v2594
    %2633 = vmatprep.subr.bf16.mxu0 0
    %2634 = vmatpush1.bf16.msra.mxu0 %v2595
    %2635 = vmatprep.subr.bf16.mxu0 0
    %2636 = vmatpush1.bf16.msra.mxu0 %v2596
    %2637 = vmatprep.subr.bf16.mxu0 0
    %2638 = vmatpush1.bf16.msra.mxu0 %v2597
    %2639 = vmatprep.subr.bf16.mxu0 0
    %2640 = vmatpush1.bf16.msra.mxu0 %v2598
    %2641 = vmatprep.subr.bf16.mxu0 0
    %2642 = vmatpush1.bf16.msra.mxu0 %v2599
    %2643 = vmatprep.subr.bf16.mxu0 0
    %2644 = vmatpush1.bf16.msra.mxu0 %v2600
    %2645 = vmatprep.subr.bf16.mxu0 0
    %2646 = vmatpush1.bf16.msra.mxu0 %v2601
    %2647 = vmatprep.subr.bf16.mxu0 0
    %2648 = vmatpush1.bf16.msra.mxu0 %v2602
    %2649 = vmatprep.subr.bf16.mxu0 0
    %2650 = vmatpush1.bf16.msra.mxu0 %v2603
    %2651 = vmatprep.subr.bf16.mxu0 0
    %2652 = vmatpush1.bf16.msra.mxu0 %v2604
    %2653 = vmatprep.mubr.bf16.mxu0 %v2486
    %2654 = vmatmul.mubr.bf16.gmra.mrb[0].mxu0 %v2485
    %v2655 = vpop.f32.mrb[0].mxu0
    %v2656 = vadd.f32 %v2524, %v2655
    %v2657 = vpop.f32.mrb[0].mxu0
    %v2658 = vpop.f32.mrb[0].mxu0
    %v2659 = vadd.f32 %v2524, %v2658
    %v2660 = vpop.f32.mrb[0].mxu0
    %2661 = vmatprep.mubr.bf16.mxu0 %v2488
    %2662 = vmatmul.mubr.bf16.gmra.mrb[0].mxu0 %v2487
    %v2663 = vpop.f32.mrb[0].mxu0
    %v2664 = vadd.f32 %v2524, %v2663
    %v2665 = vpop.f32.mrb[0].mxu0
    %v2666 = vpop.f32.mrb[0].mxu0
    %v2667 = vadd.f32 %v2524, %v2666
    %v2668 = vpop.f32.mrb[0].mxu0
    %2669 = vdwg.mxu0
    %v2670 = vadd.f32 %v2310, %v2656
    %v2671 = vadd.f32 %v2311, %v2659
    %v2672 = vadd.f32 %v2312, %v2664
    %v2673 = vadd.f32 %v2313, %v2667
    %v2674 = vsel %vm556, %v2670, 0.0
    %2675 = vadd.xlane.f32.xlu0 %v2674
    %v2676 = vpop.xlane.xlu0 %2675
    %v2677 = vsel %vm556, %v2671, 0.0
    %2678 = vadd.xlane.f32.xlu0 %v2677
    %v2679 = vpop.xlane.xlu0 %2678
    %v2680 = vsel %vm556, %v2672, 0.0
    %2681 = vadd.xlane.f32.xlu0 %v2680
    %v2682 = vpop.xlane.xlu0 %2681
    %v2683 = vsel %vm556, %v2673, 0.0
    %2684 = vadd.xlane.f32.xlu0 %v2683
    %v2685 = vpop.xlane.xlu0 %2684
    %v2686 = vmul.f32 %v2676, %v2169
    %v2687 = vmul.f32 %v2679, %v2169
    %v2688 = vmul.f32 %v2682, %v2169
    %v2689 = vmul.f32 %v2685, %v2169
    %v2690 = vsub.f32 %v2670, %v2686
    %v2691 = vsub.f32 %v2671, %v2687
    %v2692 = vsub.f32 %v2672, %v2688
    %v2693 = vsub.f32 %v2673, %v2689
    %v2694 = vmul.f32 %v2690, %v2690
    %v2695 = vmul.f32 %v2691, %v2691
    %v2696 = vmul.f32 %v2692, %v2692
    %v2697 = vmul.f32 %v2693, %v2693
    %v2698 = vsel %vm556, %v2694, 0.0
    %2699 = vadd.xlane.f32.xlu0 %v2698
    %v2700 = vpop.xlane.xlu0 %2699
    %v2701 = vsel %vm556, %v2695, 0.0
    %2702 = vadd.xlane.f32.xlu0 %v2701
    %v2703 = vpop.xlane.xlu0 %2702
    %v2704 = vsel %vm556, %v2696, 0.0
    %2705 = vadd.xlane.f32.xlu0 %v2704
    %v2706 = vpop.xlane.xlu0 %2705
    %v2707 = vsel %vm556, %v2697, 0.0
    %2708 = vadd.xlane.f32.xlu0 %v2707
    %v2709 = vpop.xlane.xlu0 %2708
    %v2710 = vmul.f32 %v2700, %v2169
    %v2711 = vmul.f32 %v2703, %v2169
    %v2712 = vmul.f32 %v2706, %v2169
    %v2713 = vmul.f32 %v2709, %v2169
    %v2714 = vadd.f32 %v2710, 1e-05
    %v2715 = vadd.f32 %v2711, 1e-05
    %v2716 = vadd.f32 %v2712, 1e-05
    %v2717 = vadd.f32 %v2713, 1e-05
    %v2718 = vrsqrt.pop %v2714
    %v2719 = vrsqrt.pop %v2715
    %v2720 = vrsqrt.pop %v2716
    %v2721 = vrsqrt.pop %v2717
    %v2722 = vmul.f32 %v2690, %v2718
    %v2723 = vmul.f32 %v2691, %v2719
    %v2724 = vmul.f32 %v2692, %v2720
    %v2725 = vmul.f32 %v2693, %v2721
    %2730 = vrot.lane.b32.xlu0 %v2670, 64
    %v2731 = vpop.permute.xlu0 %2730
    %2732 = vrot.lane.b32.xlu0 %v2671, 64
    %v2733 = vpop.permute.xlu0 %2732
    %2734 = vrot.lane.b32.xlu0 %v2672, 64
    %v2735 = vpop.permute.xlu0 %2734
    %2736 = vrot.lane.b32.xlu0 %v2673, 64
    %v2737 = vpop.permute.xlu0 %2736
    %v2742 = vsel %vm556, %v2731, 0.0
    %2743 = vadd.xlane.f32.xlu0 %v2742
    %v2744 = vpop.xlane.xlu0 %2743
    %v2745 = vsel %vm556, %v2733, 0.0
    %2746 = vadd.xlane.f32.xlu0 %v2745
    %v2747 = vpop.xlane.xlu0 %2746
    %v2748 = vsel %vm556, %v2735, 0.0
    %2749 = vadd.xlane.f32.xlu0 %v2748
    %v2750 = vpop.xlane.xlu0 %2749
    %v2751 = vsel %vm556, %v2737, 0.0
    %2752 = vadd.xlane.f32.xlu0 %v2751
    %v2753 = vpop.xlane.xlu0 %2752
    %v2754 = vmul.f32 %v2744, %v2169
    %v2755 = vmul.f32 %v2747, %v2169
    %v2756 = vmul.f32 %v2750, %v2169
    %v2757 = vmul.f32 %v2753, %v2169
    %v2758 = vsub.f32 %v2670, %v2754
    %v2759 = vsub.f32 %v2671, %v2755
    %v2760 = vsub.f32 %v2672, %v2756
    %v2761 = vsub.f32 %v2673, %v2757
    %v2762 = vmul.f32 %v2758, %v2758
    %v2763 = vmul.f32 %v2759, %v2759
    %v2764 = vmul.f32 %v2760, %v2760
    %v2765 = vmul.f32 %v2761, %v2761
    %2770 = vrot.lane.b32.xlu0 %v2762, 64
    %v2771 = vpop.permute.xlu0 %2770
    %2772 = vrot.lane.b32.xlu0 %v2763, 64
    %v2773 = vpop.permute.xlu0 %2772
    %2774 = vrot.lane.b32.xlu0 %v2764, 64
    %v2775 = vpop.permute.xlu0 %2774
    %2776 = vrot.lane.b32.xlu0 %v2765, 64
    %v2777 = vpop.permute.xlu0 %2776
    %v2782 = vsel %vm556, %v2771, 0.0
    %2783 = vadd.xlane.f32.xlu0 %v2782
    %v2784 = vpop.xlane.xlu0 %2783
    %v2785 = vsel %vm556, %v2773, 0.0
    %2786 = vadd.xlane.f32.xlu0 %v2785
    %v2787 = vpop.xlane.xlu0 %2786
    %v2788 = vsel %vm556, %v2775, 0.0
    %2789 = vadd.xlane.f32.xlu0 %v2788
    %v2790 = vpop.xlane.xlu0 %2789
    %v2791 = vsel %vm556, %v2777, 0.0
    %2792 = vadd.xlane.f32.xlu0 %v2791
    %v2793 = vpop.xlane.xlu0 %2792
    %v2794 = vmul.f32 %v2784, %v2169
    %v2795 = vmul.f32 %v2787, %v2169
    %v2796 = vmul.f32 %v2790, %v2169
    %v2797 = vmul.f32 %v2793, %v2169
    %v2798 = vadd.f32 %v2794, 1e-05
    %v2799 = vadd.f32 %v2795, 1e-05
    %v2800 = vadd.f32 %v2796, 1e-05
    %v2801 = vadd.f32 %v2797, 1e-05
    %v2802 = vrsqrt.pop %v2798
    %v2803 = vrsqrt.pop %v2799
    %v2804 = vrsqrt.pop %v2800
    %v2805 = vrsqrt.pop %v2801
    %v2806 = vmul.f32 %v2758, %v2802
    %v2807 = vmul.f32 %v2759, %v2803
    %v2808 = vmul.f32 %v2760, %v2804
    %v2809 = vmul.f32 %v2761, %v2805
    %v2810 = vsel %vm556, %v2722, %v2806
    %v2811 = vsel %vm556, %v2723, %v2807
    %v2812 = vsel %vm556, %v2724, %v2808
    %v2813 = vsel %vm556, %v2725, %v2809
    %v2814 = vlaneseq
    %v2815 = vshrl.u32 %v2814, 7
    %v2816 = vsub.s32 4, %v2815
    %v2817 = vrot.slane %v2013, %v2816
    %v2818 = vmul.f32 %v2810, %v2817
    %v2819 = vmul.f32 %v2811, %v2817
    %v2820 = vmul.f32 %v2812, %v2817
    %v2821 = vmul.f32 %v2813, %v2817
    %v2822 = vlaneseq
    %v2823 = vshrl.u32 %v2822, 7
    %v2824 = vsub.s32 5, %v2823
    %v2825 = vrot.slane %v2013, %v2824
    %v2826 = vadd.f32 %v2818, %v2825
    %v2827 = vadd.f32 %v2819, %v2825
    %v2828 = vadd.f32 %v2820, %v2825
    %v2829 = vadd.f32 %v2821, %v2825
    %2830 = vst [vmem:[#allocation7] sm:$0xff] %v2826
    %2831 = vst [vmem:[#allocation7 + $0x8] sm:$0xff] %v2827
    %2832 = vst [vmem:[#allocation7 + $0x10] sm:$0xff] %v2828
    %2833 = vst [vmem:[#allocation7 + $0x18] sm:$0xff] %v2829
    // Predicated region
    $region50: #{tpu_custom_call.1} parent=1 // pred_check
      _
    $region51: #{tpu_custom_call.1} parent=1 // pred_check_branch
      %2835 = sbr.rel (0) target = $region53
    $region52: #{tpu_custom_call.1} parent=1 // pred_region
      %s2837 = ssub.s32 512, 512
      %2838 = vsyncadd [#allocation4], %s2837
      %s2839 = sshll.u32 [#allocation7], 4
      %s2840 = int_to_ptr.vmem [resolvable:$true] %s2839
      %2845 = dma.vmem_to_hbm [thread:$0]  %s2840, 512, %s10, [#allocation4], 128, 128, 8
    $region53: #{tpu_custom_call.1} parent=1 // pred_fallthru
      _
    // Predicated region
    $region54: #{tpu_custom_call.1} parent=1 // pred_check
      _
    $region55: #{tpu_custom_call.1} parent=1 // pred_check_branch
      %2847 = sbr.rel (0) target = $region57
    $region56: #{tpu_custom_call.1} parent=1 // pred_region
      %2848 = dma.done [#allocation4], 512
    $region57: #{tpu_custom_call.1} parent=1 // pred_fallthru
      _
    %2849 = vsyncpa [#allocation3], 1
    %2850 = vsyncpa [#allocation6], 1
    %2851 = vsyncpa [#allocation4], 1

</llo_original>
